<compile_context>
chip_gen: v7x
topology: tpu7x:2x2x1
jax: 0.10.0
libtpu: 0.0.40
codegen_flags: <defaults>
</compile_context>

<pallas_src>
import jax
import jax.numpy as jnp
from jax.experimental import pallas as pl
from jax.experimental.pallas import tpu as pltpu


def _round_up(x, m):
    return ((x + m - 1) // m) * m


def _pad_gate_cols(w, h, hp):
    """(in, 4h) -> (in, 4hp): zero-pad each PyTorch gate block (i, f, g, o)."""
    if hp == h:
        return w
    blocks = jnp.split(w, 4, axis=1)
    blocks = [jnp.pad(blk, ((0, 0), (0, hp - h))) for blk in blocks]
    return jnp.concatenate(blocks, axis=1)


def _device_defaults():
    """(tile_n, vmem_limit_bytes) per TPU generation; conservative fallback."""
    try:
        kind = jax.devices()[0].device_kind.lower()
    except Exception:
        kind = ""
    if "v7" in kind:
        return 2048, 48 * 1024 * 1024     # 64 MiB physical VMEM -> leave headroom
    if "v6" in kind or "v5" in kind:
        return 8192, 100 * 1024 * 1024    # 128 MiB physical VMEM
    return 2048, 48 * 1024 * 1024         # unknown chip: safe everywhere


# ----------------------------------------------------------------------------
# Prologue kernel: embedding gather + LSTM cell (runs once per call)
# ----------------------------------------------------------------------------
def _lstm_prologue_kernel(tokens_ref,            # SMEM  (B,) int32 (scalar prefetch)
                          emb_hbm,               # HBM   (vocab, E) f32
                          h_ref, c_ref,          # VMEM  (B, Hp) f32
                          w_ih_ref, w_hh_ref,    # VMEM  (E,4Hp)/(Hp,4Hp) bf16
                          b_ref,                 # VMEM  (1, 4Hp) f32
                          h_bf_ref,              # VMEM  (B, Hp) bf16 out (for fc stream)
                          h_out_ref, c_out_ref,  # VMEM  (B, Hp) f32 out (new state)
                          emb_scr, gather_sems):  # scratch: (B, E) f32, DMA sems (B,)
    B = h_ref.shape[0]
    Hp = h_ref.shape[1]

    # In-kernel embedding gather: issue all B row DMAs, then wait (gather runs
    # once per call now, so its latency is off the streaming critical path).
    copies = []
    for b in range(B):
        cp = pltpu.make_async_copy(
            emb_hbm.at[pl.ds(tokens_ref[b], 1), :],
            emb_scr.at[pl.ds(b, 1), :],
            gather_sems.at[b],
        )
        cp.start()
        copies.append(cp)
    for cp in copies:
        cp.wait()

    x = emb_scr[...].astype(w_ih_ref.dtype)        # (B, E)  bf16 for the MXU
    h = h_ref[...]                                 # (B, Hp) f32
    c = c_ref[...]                                 # (B, Hp) f32

    # gates = x @ W_ih + h @ W_hh + (b_ih + b_hh); PyTorch gate order i, f, g, o.
    gates = (jnp.dot(x, w_ih_ref[...], preferred_element_type=jnp.float32)
             + jnp.dot(h.astype(w_hh_ref.dtype), w_hh_ref[...],
                       preferred_element_type=jnp.float32)
             + b_ref[...])                          # (B, 4Hp) f32

    # Lane-aligned gate slices (Hp is a multiple of 128).
    i_g = jax.nn.sigmoid(gates[:, 0 * Hp:1 * Hp])
    f_g = jax.nn.sigmoid(gates[:, 1 * Hp:2 * Hp])
    g_g = jnp.tanh(gates[:, 2 * Hp:3 * Hp])
    o_g = jax.nn.sigmoid(gates[:, 3 * Hp:4 * Hp])

    c_new = f_g * c + i_g * g_g
    h_new = o_g * jnp.tanh(c_new)

    h_out_ref[...] = h_new
    c_out_ref[...] = c_new
    h_bf_ref[...] = h_new.astype(h_bf_ref.dtype)   # cast hoisted out of the fc loop


# ----------------------------------------------------------------------------
# Streaming kernel: pure (B,Hp) @ (Hp,tile_n) per vocab tile
# ----------------------------------------------------------------------------
def _fc_stream_kernel(h_ref,                      # VMEM (B, Hp) bf16 (resident)
                      w_fc_ref, b_fc_ref,         # VMEM (Hp, TN) bf16 / (1, TN) f32
                      logits_ref):                # VMEM (B, TN) f32
    logits_ref[...] = (jnp.dot(h_ref[...], w_fc_ref[...],
                               preferred_element_type=jnp.float32)
                       + b_fc_ref[...])


# ----------------------------------------------------------------------------
# Wrapper
# ----------------------------------------------------------------------------
def decoder_forward(packed, x_tokens, hidden, cell, *, vmem_limit_bytes=None):
    """x_tokens: (B,) int32; hidden/cell: (1, B, H) — mirrors PyTorch forward."""
    H, V = packed["H"], packed["V"]
    Hp, Vp, tile_n = packed["Hp"], packed["Vp"], packed["tile_n"]
    emb_tbl = packed["embedding"]
    E = emb_tbl.shape[1]
    B = x_tokens.shape[0]
    num_tiles = Vp // tile_n
    if vmem_limit_bytes is None:
        _, vmem_limit_bytes = _device_defaults()

    h0 = hidden[0]
    c0 = cell[0]
    if Hp != H:  # zero padding is exact: padded lanes stay exactly zero.
        h0 = jnp.pad(h0, ((0, 0), (0, Hp - H)))
        c0 = jnp.pad(c0, ((0, 0), (0, Hp - H)))

    # ---- Prologue: gather + LSTM cell, once per call (grid of size 1). ----
    prologue_spec = pltpu.PrefetchScalarGridSpec(
        num_scalar_prefetch=1,                               # token ids -> SMEM
        grid=(1,),
        in_specs=[
            pl.BlockSpec(memory_space=pl.ANY),               # embedding table in HBM
            pl.BlockSpec((B, Hp), lambda i, toks: (0, 0)),   # h0
            pl.BlockSpec((B, Hp), lambda i, toks: (0, 0)),   # c0
            pl.BlockSpec((E, 4 * Hp), lambda i, toks: (0, 0)),   # W_ih (bf16)
            pl.BlockSpec((Hp, 4 * Hp), lambda i, toks: (0, 0)),  # W_hh (bf16)
            pl.BlockSpec((1, 4 * Hp), lambda i, toks: (0, 0)),   # b_ih + b_hh
        ],
        out_specs=(
            pl.BlockSpec((B, Hp), lambda i, toks: (0, 0)),   # h_new bf16 (for fc)
            pl.BlockSpec((B, Hp), lambda i, toks: (0, 0)),   # h_new f32
            pl.BlockSpec((B, Hp), lambda i, toks: (0, 0)),   # c_new f32
        ),
        scratch_shapes=[
            pltpu.VMEM((B, E), jnp.float32),                 # gathered embedding rows
            pltpu.SemaphoreType.DMA((B,)),                   # one DMA sem per row
        ],
    )
    h_bf, h_new, c_new = pl.pallas_call(
        _lstm_prologue_kernel,
        out_shape=(
            jax.ShapeDtypeStruct((B, Hp), jnp.bfloat16),
            jax.ShapeDtypeStruct((B, Hp), jnp.float32),
            jax.ShapeDtypeStruct((B, Hp), jnp.float32),
        ),
        grid_spec=prologue_spec,
        compiler_params=pltpu.CompilerParams(
            dimension_semantics=("arbitrary",),
            vmem_limit_bytes=vmem_limit_bytes,
        ),
    )(x_tokens.astype(jnp.int32), emb_tbl, h0, c0,
      packed["w_ih"], packed["w_hh"], packed["b"])

    # ---- Streaming fc projection over vocab tiles (HBM-bandwidth bound). ----
    stream_spec = pltpu.PrefetchScalarGridSpec(
        num_scalar_prefetch=0,
        grid=(num_tiles,),
        in_specs=[
            pl.BlockSpec((B, Hp), lambda j: (0, 0)),         # h_new bf16 (resident, tiny)
            pl.BlockSpec((Hp, tile_n), lambda j: (0, j)),    # W_fc  (streamed)
            pl.BlockSpec((1, tile_n), lambda j: (0, j)),     # b_fc  (streamed)
        ],
        out_specs=pl.BlockSpec((B, tile_n), lambda j: (0, j)),   # lane-dense logits tile
    )
    logits_p = pl.pallas_call(
        _fc_stream_kernel,
        out_shape=jax.ShapeDtypeStruct((B, Vp), jnp.float32),
        grid_spec=stream_spec,
        compiler_params=pltpu.CompilerParams(
            dimension_semantics=("parallel",),               # vocab tiles independent
            vmem_limit_bytes=vmem_limit_bytes,
        ),
    )(h_bf, packed["w_fc"], packed["b_fc"])

    # Un-pad and restore PyTorch (num_layers=1, B, H) convention.
    logits = logits_p[:, :V]
    h1 = h_new[:, :H][None]
    c1 = c_new[:, :H][None]
    return logits, h1, c1


# ----------------------------------------------------------------------------
# Parameter construction / packing
# ----------------------------------------------------------------------------
def init_params(key, vocab_size, embed_size, hidden_size):
    """Raw f32 params equivalent to the PyTorch module (weights stored (in, out))."""
    ks = jax.random.split(key, 7)
    scale = 0.1
    embedding = scale * jax.random.normal(ks[0], (vocab_size, embed_size), jnp.float32)
    embedding = embedding.at[0].set(0.0)                     # padding_idx=0
    w_ih = scale * jax.random.normal(ks[1], (embed_size, 4 * hidden_size), jnp.float32)
    w_hh = scale * jax.random.normal(ks[2], (hidden_size, 4 * hidden_size), jnp.float32)
    b_ih = scale * jax.random.normal(ks[3], (4 * hidden_size,), jnp.float32)
    b_hh = scale * jax.random.normal(ks[4], (4 * hidden_size,), jnp.float32)
    w_fc = scale * jax.random.normal(ks[5], (hidden_size, vocab_size), jnp.float32)
    b_fc = scale * jax.random.normal(ks[6], (vocab_size,), jnp.float32)
    return {"embedding": embedding, "w_ih": w_ih, "w_hh": w_hh,
            "b_ih": b_ih, "b_hh": b_hh, "w_fc": w_fc, "b_fc": b_fc}


def pack_params(raw, tile_n=None):
    """Pad to lane-aligned shapes and cast MXU weights to bf16 (done once)."""
    if tile_n is None:
        tile_n, _ = _device_defaults()
    tile_n = _round_up(tile_n, 128)

    E, four_h = raw["w_ih"].shape
    H = four_h // 4
    V = raw["w_fc"].shape[1]
    Hp = _round_up(H, 128)
    Vp = _round_up(V, tile_n)

    w_ih = _pad_gate_cols(raw["w_ih"], H, Hp).astype(jnp.bfloat16)
    w_hh = _pad_gate_cols(jnp.pad(raw["w_hh"], ((0, Hp - H), (0, 0))),
                          H, Hp).astype(jnp.bfloat16)
    b = _pad_gate_cols((raw["b_ih"] + raw["b_hh"])[None, :], H, Hp).astype(jnp.float32)
    w_fc = jnp.pad(raw["w_fc"], ((0, Hp - H), (0, Vp - V))).astype(jnp.bfloat16)
    b_fc = jnp.pad(raw["b_fc"], (0, Vp - V))[None, :].astype(jnp.float32)

    return {
        # f32 table: only B rows are ever DMA'd (once per call), and the
        # reference casts after the gather, so numerics match exactly.
        "embedding": raw["embedding"].astype(jnp.float32),
        "w_ih": w_ih, "w_hh": w_hh, "b": b, "w_fc": w_fc, "b_fc": b_fc,
        # Static metadata (plain Python ints — not intended as traced jit args).
        "H": H, "V": V, "Hp": Hp, "Vp": Vp, "tile_n": tile_n,
    }


# ----------------------------------------------------------------------------
# Pure-JAX reference with matching (bf16 matmul, f32 accumulate) precision
# ----------------------------------------------------------------------------
def decoder_forward_ref(raw, x_tokens, hidden, cell):
    bf = jnp.bfloat16
    emb = jnp.take(raw["embedding"], x_tokens, axis=0).astype(bf)
    h, c = hidden[0], cell[0]
    gates = (jnp.dot(emb, raw["w_ih"].astype(bf), preferred_element_type=jnp.float32)
             + jnp.dot(h.astype(bf), raw["w_hh"].astype(bf),
                       preferred_element_type=jnp.float32)
             + (raw["b_ih"] + raw["b_hh"])[None, :])
    H = h.shape[-1]
    i = jax.nn.sigmoid(gates[:, :H])
    f = jax.nn.sigmoid(gates[:, H:2 * H])
    g = jnp.tanh(gates[:, 2 * H:3 * H])
    o = jax.nn.sigmoid(gates[:, 3 * H:])
    c_new = f * c + i * g
    h_new = o * jnp.tanh(c_new)
    logits = (jnp.dot(h_new.astype(bf), raw["w_fc"].astype(bf),
                      preferred_element_type=jnp.float32) + raw["b_fc"][None, :])
    return logits, h_new[None], c_new[None]


if __name__ == "__main__":
    vocab_size, embed_size, hidden_size = 512, 32, 32
    batch = 8
    num_layers = 1
    tile_n = 128   # demo-sized vocab tile; real sizes: 2048-4096 (v7x), up to 8192 (v5e/v6e)

    key = jax.random.PRNGKey(0)
    k_param, k_tok, k_h, k_c = jax.random.split(key, 4)

    raw = init_params(k_param, vocab_size, embed_size, hidden_size)
    packed = pack_params(raw, tile_n=tile_n)

    x = jax.random.randint(k_tok, (batch,), 0, vocab_size, dtype=jnp.int32)
    hidden = jax.random.normal(k_h, (num_layers, batch, hidden_size), jnp.float32)
    cell = jax.random.normal(k_c, (num_layers, batch, hidden_size), jnp.float32)

    logits, h1, c1 = decoder_forward(packed, x, hidden, cell)
    jax.block_until_ready((logits, h1, c1))

    ref_logits, ref_h1, ref_c1 = decoder_forward_ref(raw, x, hidden, cell)

    assert logits.shape == (batch, vocab_size)
    assert h1.shape == (num_layers, batch, hidden_size)
    assert c1.shape == (num_layers, batch, hidden_size)
    assert jnp.allclose(logits, ref_logits, atol=1e-2, rtol=1e-2), \
        float(jnp.max(jnp.abs(logits - ref_logits)))
    assert jnp.allclose(h1, ref_h1, atol=1e-2, rtol=1e-2), \
        float(jnp.max(jnp.abs(h1 - ref_h1)))
    assert jnp.allclose(c1, ref_c1, atol=1e-2, rtol=1e-2), \
        float(jnp.max(jnp.abs(c1 - ref_c1)))

    # TODO(synk): for a multi-step autoregressive loop, add a time grid axis so
    # W_ih/W_hh stay VMEM-resident across steps instead of re-streaming per call.
    print("KERNEL_OK")
</pallas_src>

<mosaic_0001>
module attributes {stable_mosaic.version = 11 : i64} {
  func.func @_lstm_prologue_kernel(%arg0: i32, %arg1: memref<8xi32, #tpu.memory_space<smem>>, %arg2: memref<512x32xf32, #tpu.memory_space<any>>, %arg3: memref<8x128xf32, #tpu.memory_space<vmem>>, %arg4: memref<8x128xf32, #tpu.memory_space<vmem>>, %arg5: memref<32x512xbf16, #tpu.memory_space<vmem>>, %arg6: memref<128x512xbf16, #tpu.memory_space<vmem>>, %arg7: memref<1x512xf32, #tpu.memory_space<vmem>>, %arg8: memref<8x128xbf16, #tpu.memory_space<vmem>>, %arg9: memref<8x128xf32, #tpu.memory_space<vmem>>, %arg10: memref<8x128xf32, #tpu.memory_space<vmem>>, %arg11: memref<8x32xf32, #tpu.memory_space<vmem>>, %arg12: memref<8x!tpu.dma_semaphore, #tpu.memory_space<semaphore_mem>>) attributes {dimension_semantics = [#tpu.dimension_semantics<arbitrary>], iteration_bounds = array<i64: 1>, scalar_prefetch = 1 : i64, scratch_operands = 2 : i64, tpu.core_type = #tpu.core_type<tc>, window_params = [{}, {pipeline_mode = #tpu.pipeline_mode<synchronous>, transform_indices = @transform_1, window_bounds = array<i64: 8, 128>}, {pipeline_mode = #tpu.pipeline_mode<synchronous>, transform_indices = @transform_2, window_bounds = array<i64: 8, 128>}, {pipeline_mode = #tpu.pipeline_mode<synchronous>, transform_indices = @transform_3, window_bounds = array<i64: 32, 512>}, {pipeline_mode = #tpu.pipeline_mode<synchronous>, transform_indices = @transform_4, window_bounds = array<i64: 128, 512>}, {pipeline_mode = #tpu.pipeline_mode<synchronous>, transform_indices = @transform_5, window_bounds = array<i64: 1, 512>}, {pipeline_mode = #tpu.pipeline_mode<synchronous>, transform_indices = @transform_6, window_bounds = array<i64: 8, 128>}, {pipeline_mode = #tpu.pipeline_mode<synchronous>, transform_indices = @transform_7, window_bounds = array<i64: 8, 128>}, {pipeline_mode = #tpu.pipeline_mode<synchronous>, transform_indices = @transform_8, window_bounds = array<i64: 8, 128>}]} {
    %c0 = arith.constant 0 : index
    %0 = memref.load %arg1[%c0] : memref<8xi32, #tpu.memory_space<smem>>
    %c0_i32 = arith.constant 0 : i32
    %c0_i32_0 = arith.constant 0 : i32
    %1 = tpu.memref_slice %arg2[%0, %c0_i32_0] : memref<512x32xf32, #tpu.memory_space<any>> -> memref<1x32xf32, #tpu.memory_space<any>>
    %c0_i32_1 = arith.constant 0 : i32
    %c0_i32_2 = arith.constant 0 : i32
    %2 = tpu.memref_slice %arg11[%c0_i32_1, %c0_i32_2] : memref<8x32xf32, #tpu.memory_space<vmem>> -> memref<1x32xf32, #tpu.memory_space<vmem>>
    %3 = tpu.memref_slice %arg12[%c0_i32] : memref<8x!tpu.dma_semaphore, #tpu.memory_space<semaphore_mem>> -> memref<1x!tpu.dma_semaphore, #tpu.memory_space<semaphore_mem>>
    %4 = tpu.memref_squeeze %3 : memref<1x!tpu.dma_semaphore, #tpu.memory_space<semaphore_mem>> -> memref<!tpu.dma_semaphore, #tpu.memory_space<semaphore_mem>>
    tpu.enqueue_dma source(%1 : memref<1x32xf32, #tpu.memory_space<any>>) target(%2 : memref<1x32xf32, #tpu.memory_space<vmem>>) target_semaphore(%4 : memref<!tpu.dma_semaphore, #tpu.memory_space<semaphore_mem>>)
    %c1 = arith.constant 1 : index
    %5 = memref.load %arg1[%c1] : memref<8xi32, #tpu.memory_space<smem>>
    %c1_i32 = arith.constant 1 : i32
    %c0_i32_3 = arith.constant 0 : i32
    %6 = tpu.memref_slice %arg2[%5, %c0_i32_3] : memref<512x32xf32, #tpu.memory_space<any>> -> memref<1x32xf32, #tpu.memory_space<any>>
    %c1_i32_4 = arith.constant 1 : i32
    %c0_i32_5 = arith.constant 0 : i32
    %7 = tpu.memref_slice %arg11[%c1_i32_4, %c0_i32_5] : memref<8x32xf32, #tpu.memory_space<vmem>> -> memref<1x32xf32, #tpu.memory_space<vmem>>
    %8 = tpu.memref_slice %arg12[%c1_i32] : memref<8x!tpu.dma_semaphore, #tpu.memory_space<semaphore_mem>> -> memref<1x!tpu.dma_semaphore, #tpu.memory_space<semaphore_mem>>
    %9 = tpu.memref_squeeze %8 : memref<1x!tpu.dma_semaphore, #tpu.memory_space<semaphore_mem>> -> memref<!tpu.dma_semaphore, #tpu.memory_space<semaphore_mem>>
    tpu.enqueue_dma source(%6 : memref<1x32xf32, #tpu.memory_space<any>>) target(%7 : memref<1x32xf32, #tpu.memory_space<vmem>>) target_semaphore(%9 : memref<!tpu.dma_semaphore, #tpu.memory_space<semaphore_mem>>)
    %c2 = arith.constant 2 : index
    %10 = memref.load %arg1[%c2] : memref<8xi32, #tpu.memory_space<smem>>
    %c2_i32 = arith.constant 2 : i32
    %c0_i32_6 = arith.constant 0 : i32
    %11 = tpu.memref_slice %arg2[%10, %c0_i32_6] : memref<512x32xf32, #tpu.memory_space<any>> -> memref<1x32xf32, #tpu.memory_space<any>>
    %c2_i32_7 = arith.constant 2 : i32
    %c0_i32_8 = arith.constant 0 : i32
    %12 = tpu.memref_slice %arg11[%c2_i32_7, %c0_i32_8] : memref<8x32xf32, #tpu.memory_space<vmem>> -> memref<1x32xf32, #tpu.memory_space<vmem>>
    %13 = tpu.memref_slice %arg12[%c2_i32] : memref<8x!tpu.dma_semaphore, #tpu.memory_space<semaphore_mem>> -> memref<1x!tpu.dma_semaphore, #tpu.memory_space<semaphore_mem>>
    %14 = tpu.memref_squeeze %13 : memref<1x!tpu.dma_semaphore, #tpu.memory_space<semaphore_mem>> -> memref<!tpu.dma_semaphore, #tpu.memory_space<semaphore_mem>>
    tpu.enqueue_dma source(%11 : memref<1x32xf32, #tpu.memory_space<any>>) target(%12 : memref<1x32xf32, #tpu.memory_space<vmem>>) target_semaphore(%14 : memref<!tpu.dma_semaphore, #tpu.memory_space<semaphore_mem>>)
    %c3 = arith.constant 3 : index
    %15 = memref.load %arg1[%c3] : memref<8xi32, #tpu.memory_space<smem>>
    %c3_i32 = arith.constant 3 : i32
    %c0_i32_9 = arith.constant 0 : i32
    %16 = tpu.memref_slice %arg2[%15, %c0_i32_9] : memref<512x32xf32, #tpu.memory_space<any>> -> memref<1x32xf32, #tpu.memory_space<any>>
    %c3_i32_10 = arith.constant 3 : i32
    %c0_i32_11 = arith.constant 0 : i32
    %17 = tpu.memref_slice %arg11[%c3_i32_10, %c0_i32_11] : memref<8x32xf32, #tpu.memory_space<vmem>> -> memref<1x32xf32, #tpu.memory_space<vmem>>
    %18 = tpu.memref_slice %arg12[%c3_i32] : memref<8x!tpu.dma_semaphore, #tpu.memory_space<semaphore_mem>> -> memref<1x!tpu.dma_semaphore, #tpu.memory_space<semaphore_mem>>
    %19 = tpu.memref_squeeze %18 : memref<1x!tpu.dma_semaphore, #tpu.memory_space<semaphore_mem>> -> memref<!tpu.dma_semaphore, #tpu.memory_space<semaphore_mem>>
    tpu.enqueue_dma source(%16 : memref<1x32xf32, #tpu.memory_space<any>>) target(%17 : memref<1x32xf32, #tpu.memory_space<vmem>>) target_semaphore(%19 : memref<!tpu.dma_semaphore, #tpu.memory_space<semaphore_mem>>)
    %c4 = arith.constant 4 : index
    %20 = memref.load %arg1[%c4] : memref<8xi32, #tpu.memory_space<smem>>
    %c4_i32 = arith.constant 4 : i32
    %c0_i32_12 = arith.constant 0 : i32
    %21 = tpu.memref_slice %arg2[%20, %c0_i32_12] : memref<512x32xf32, #tpu.memory_space<any>> -> memref<1x32xf32, #tpu.memory_space<any>>
    %c4_i32_13 = arith.constant 4 : i32
    %c0_i32_14 = arith.constant 0 : i32
    %22 = tpu.memref_slice %arg11[%c4_i32_13, %c0_i32_14] : memref<8x32xf32, #tpu.memory_space<vmem>> -> memref<1x32xf32, #tpu.memory_space<vmem>>
    %23 = tpu.memref_slice %arg12[%c4_i32] : memref<8x!tpu.dma_semaphore, #tpu.memory_space<semaphore_mem>> -> memref<1x!tpu.dma_semaphore, #tpu.memory_space<semaphore_mem>>
    %24 = tpu.memref_squeeze %23 : memref<1x!tpu.dma_semaphore, #tpu.memory_space<semaphore_mem>> -> memref<!tpu.dma_semaphore, #tpu.memory_space<semaphore_mem>>
    tpu.enqueue_dma source(%21 : memref<1x32xf32, #tpu.memory_space<any>>) target(%22 : memref<1x32xf32, #tpu.memory_space<vmem>>) target_semaphore(%24 : memref<!tpu.dma_semaphore, #tpu.memory_space<semaphore_mem>>)
    %c5 = arith.constant 5 : index
    %25 = memref.load %arg1[%c5] : memref<8xi32, #tpu.memory_space<smem>>
    %c5_i32 = arith.constant 5 : i32
    %c0_i32_15 = arith.constant 0 : i32
    %26 = tpu.memref_slice %arg2[%25, %c0_i32_15] : memref<512x32xf32, #tpu.memory_space<any>> -> memref<1x32xf32, #tpu.memory_space<any>>
    %c5_i32_16 = arith.constant 5 : i32
    %c0_i32_17 = arith.constant 0 : i32
    %27 = tpu.memref_slice %arg11[%c5_i32_16, %c0_i32_17] : memref<8x32xf32, #tpu.memory_space<vmem>> -> memref<1x32xf32, #tpu.memory_space<vmem>>
    %28 = tpu.memref_slice %arg12[%c5_i32] : memref<8x!tpu.dma_semaphore, #tpu.memory_space<semaphore_mem>> -> memref<1x!tpu.dma_semaphore, #tpu.memory_space<semaphore_mem>>
    %29 = tpu.memref_squeeze %28 : memref<1x!tpu.dma_semaphore, #tpu.memory_space<semaphore_mem>> -> memref<!tpu.dma_semaphore, #tpu.memory_space<semaphore_mem>>
    tpu.enqueue_dma source(%26 : memref<1x32xf32, #tpu.memory_space<any>>) target(%27 : memref<1x32xf32, #tpu.memory_space<vmem>>) target_semaphore(%29 : memref<!tpu.dma_semaphore, #tpu.memory_space<semaphore_mem>>)
    %c6 = arith.constant 6 : index
    %30 = memref.load %arg1[%c6] : memref<8xi32, #tpu.memory_space<smem>>
    %c6_i32 = arith.constant 6 : i32
    %c0_i32_18 = arith.constant 0 : i32
    %31 = tpu.memref_slice %arg2[%30, %c0_i32_18] : memref<512x32xf32, #tpu.memory_space<any>> -> memref<1x32xf32, #tpu.memory_space<any>>
    %c6_i32_19 = arith.constant 6 : i32
    %c0_i32_20 = arith.constant 0 : i32
    %32 = tpu.memref_slice %arg11[%c6_i32_19, %c0_i32_20] : memref<8x32xf32, #tpu.memory_space<vmem>> -> memref<1x32xf32, #tpu.memory_space<vmem>>
    %33 = tpu.memref_slice %arg12[%c6_i32] : memref<8x!tpu.dma_semaphore, #tpu.memory_space<semaphore_mem>> -> memref<1x!tpu.dma_semaphore, #tpu.memory_space<semaphore_mem>>
    %34 = tpu.memref_squeeze %33 : memref<1x!tpu.dma_semaphore, #tpu.memory_space<semaphore_mem>> -> memref<!tpu.dma_semaphore, #tpu.memory_space<semaphore_mem>>
    tpu.enqueue_dma source(%31 : memref<1x32xf32, #tpu.memory_space<any>>) target(%32 : memref<1x32xf32, #tpu.memory_space<vmem>>) target_semaphore(%34 : memref<!tpu.dma_semaphore, #tpu.memory_space<semaphore_mem>>)
    %c7 = arith.constant 7 : index
    %35 = memref.load %arg1[%c7] : memref<8xi32, #tpu.memory_space<smem>>
    %c7_i32 = arith.constant 7 : i32
    %c0_i32_21 = arith.constant 0 : i32
    %36 = tpu.memref_slice %arg2[%35, %c0_i32_21] : memref<512x32xf32, #tpu.memory_space<any>> -> memref<1x32xf32, #tpu.memory_space<any>>
    %c7_i32_22 = arith.constant 7 : i32
    %c0_i32_23 = arith.constant 0 : i32
    %37 = tpu.memref_slice %arg11[%c7_i32_22, %c0_i32_23] : memref<8x32xf32, #tpu.memory_space<vmem>> -> memref<1x32xf32, #tpu.memory_space<vmem>>
    %38 = tpu.memref_slice %arg12[%c7_i32] : memref<8x!tpu.dma_semaphore, #tpu.memory_space<semaphore_mem>> -> memref<1x!tpu.dma_semaphore, #tpu.memory_space<semaphore_mem>>
    %39 = tpu.memref_squeeze %38 : memref<1x!tpu.dma_semaphore, #tpu.memory_space<semaphore_mem>> -> memref<!tpu.dma_semaphore, #tpu.memory_space<semaphore_mem>>
    tpu.enqueue_dma source(%36 : memref<1x32xf32, #tpu.memory_space<any>>) target(%37 : memref<1x32xf32, #tpu.memory_space<vmem>>) target_semaphore(%39 : memref<!tpu.dma_semaphore, #tpu.memory_space<semaphore_mem>>)
    %c0_i32_24 = arith.constant 0 : i32
    %c0_i32_25 = arith.constant 0 : i32
    %40 = tpu.memref_slice %arg2[%0, %c0_i32_25] : memref<512x32xf32, #tpu.memory_space<any>> -> memref<1x32xf32, #tpu.memory_space<any>>
    %c0_i32_26 = arith.constant 0 : i32
    %c0_i32_27 = arith.constant 0 : i32
    %41 = tpu.memref_slice %arg11[%c0_i32_26, %c0_i32_27] : memref<8x32xf32, #tpu.memory_space<vmem>> -> memref<1x32xf32, #tpu.memory_space<vmem>>
    %42 = tpu.memref_slice %arg12[%c0_i32_24] : memref<8x!tpu.dma_semaphore, #tpu.memory_space<semaphore_mem>> -> memref<1x!tpu.dma_semaphore, #tpu.memory_space<semaphore_mem>>
    %43 = tpu.memref_squeeze %42 : memref<1x!tpu.dma_semaphore, #tpu.memory_space<semaphore_mem>> -> memref<!tpu.dma_semaphore, #tpu.memory_space<semaphore_mem>>
    tpu.wait_dma2 semaphore(%43 : memref<!tpu.dma_semaphore, #tpu.memory_space<semaphore_mem>>) src(%40 : memref<1x32xf32, #tpu.memory_space<any>>) dst(%41 : memref<1x32xf32, #tpu.memory_space<vmem>>)
    %c1_i32_28 = arith.constant 1 : i32
    %c0_i32_29 = arith.constant 0 : i32
    %44 = tpu.memref_slice %arg2[%5, %c0_i32_29] : memref<512x32xf32, #tpu.memory_space<any>> -> memref<1x32xf32, #tpu.memory_space<any>>
    %c1_i32_30 = arith.constant 1 : i32
    %c0_i32_31 = arith.constant 0 : i32
    %45 = tpu.memref_slice %arg11[%c1_i32_30, %c0_i32_31] : memref<8x32xf32, #tpu.memory_space<vmem>> -> memref<1x32xf32, #tpu.memory_space<vmem>>
    %46 = tpu.memref_slice %arg12[%c1_i32_28] : memref<8x!tpu.dma_semaphore, #tpu.memory_space<semaphore_mem>> -> memref<1x!tpu.dma_semaphore, #tpu.memory_space<semaphore_mem>>
    %47 = tpu.memref_squeeze %46 : memref<1x!tpu.dma_semaphore, #tpu.memory_space<semaphore_mem>> -> memref<!tpu.dma_semaphore, #tpu.memory_space<semaphore_mem>>
    tpu.wait_dma2 semaphore(%47 : memref<!tpu.dma_semaphore, #tpu.memory_space<semaphore_mem>>) src(%44 : memref<1x32xf32, #tpu.memory_space<any>>) dst(%45 : memref<1x32xf32, #tpu.memory_space<vmem>>)
    %c2_i32_32 = arith.constant 2 : i32
    %c0_i32_33 = arith.constant 0 : i32
    %48 = tpu.memref_slice %arg2[%10, %c0_i32_33] : memref<512x32xf32, #tpu.memory_space<any>> -> memref<1x32xf32, #tpu.memory_space<any>>
    %c2_i32_34 = arith.constant 2 : i32
    %c0_i32_35 = arith.constant 0 : i32
    %49 = tpu.memref_slice %arg11[%c2_i32_34, %c0_i32_35] : memref<8x32xf32, #tpu.memory_space<vmem>> -> memref<1x32xf32, #tpu.memory_space<vmem>>
    %50 = tpu.memref_slice %arg12[%c2_i32_32] : memref<8x!tpu.dma_semaphore, #tpu.memory_space<semaphore_mem>> -> memref<1x!tpu.dma_semaphore, #tpu.memory_space<semaphore_mem>>
    %51 = tpu.memref_squeeze %50 : memref<1x!tpu.dma_semaphore, #tpu.memory_space<semaphore_mem>> -> memref<!tpu.dma_semaphore, #tpu.memory_space<semaphore_mem>>
    tpu.wait_dma2 semaphore(%51 : memref<!tpu.dma_semaphore, #tpu.memory_space<semaphore_mem>>) src(%48 : memref<1x32xf32, #tpu.memory_space<any>>) dst(%49 : memref<1x32xf32, #tpu.memory_space<vmem>>)
    %c3_i32_36 = arith.constant 3 : i32
    %c0_i32_37 = arith.constant 0 : i32
    %52 = tpu.memref_slice %arg2[%15, %c0_i32_37] : memref<512x32xf32, #tpu.memory_space<any>> -> memref<1x32xf32, #tpu.memory_space<any>>
    %c3_i32_38 = arith.constant 3 : i32
    %c0_i32_39 = arith.constant 0 : i32
    %53 = tpu.memref_slice %arg11[%c3_i32_38, %c0_i32_39] : memref<8x32xf32, #tpu.memory_space<vmem>> -> memref<1x32xf32, #tpu.memory_space<vmem>>
    %54 = tpu.memref_slice %arg12[%c3_i32_36] : memref<8x!tpu.dma_semaphore, #tpu.memory_space<semaphore_mem>> -> memref<1x!tpu.dma_semaphore, #tpu.memory_space<semaphore_mem>>
    %55 = tpu.memref_squeeze %54 : memref<1x!tpu.dma_semaphore, #tpu.memory_space<semaphore_mem>> -> memref<!tpu.dma_semaphore, #tpu.memory_space<semaphore_mem>>
    tpu.wait_dma2 semaphore(%55 : memref<!tpu.dma_semaphore, #tpu.memory_space<semaphore_mem>>) src(%52 : memref<1x32xf32, #tpu.memory_space<any>>) dst(%53 : memref<1x32xf32, #tpu.memory_space<vmem>>)
    %c4_i32_40 = arith.constant 4 : i32
    %c0_i32_41 = arith.constant 0 : i32
    %56 = tpu.memref_slice %arg2[%20, %c0_i32_41] : memref<512x32xf32, #tpu.memory_space<any>> -> memref<1x32xf32, #tpu.memory_space<any>>
    %c4_i32_42 = arith.constant 4 : i32
    %c0_i32_43 = arith.constant 0 : i32
    %57 = tpu.memref_slice %arg11[%c4_i32_42, %c0_i32_43] : memref<8x32xf32, #tpu.memory_space<vmem>> -> memref<1x32xf32, #tpu.memory_space<vmem>>
    %58 = tpu.memref_slice %arg12[%c4_i32_40] : memref<8x!tpu.dma_semaphore, #tpu.memory_space<semaphore_mem>> -> memref<1x!tpu.dma_semaphore, #tpu.memory_space<semaphore_mem>>
    %59 = tpu.memref_squeeze %58 : memref<1x!tpu.dma_semaphore, #tpu.memory_space<semaphore_mem>> -> memref<!tpu.dma_semaphore, #tpu.memory_space<semaphore_mem>>
    tpu.wait_dma2 semaphore(%59 : memref<!tpu.dma_semaphore, #tpu.memory_space<semaphore_mem>>) src(%56 : memref<1x32xf32, #tpu.memory_space<any>>) dst(%57 : memref<1x32xf32, #tpu.memory_space<vmem>>)
    %c5_i32_44 = arith.constant 5 : i32
    %c0_i32_45 = arith.constant 0 : i32
    %60 = tpu.memref_slice %arg2[%25, %c0_i32_45] : memref<512x32xf32, #tpu.memory_space<any>> -> memref<1x32xf32, #tpu.memory_space<any>>
    %c5_i32_46 = arith.constant 5 : i32
    %c0_i32_47 = arith.constant 0 : i32
    %61 = tpu.memref_slice %arg11[%c5_i32_46, %c0_i32_47] : memref<8x32xf32, #tpu.memory_space<vmem>> -> memref<1x32xf32, #tpu.memory_space<vmem>>
    %62 = tpu.memref_slice %arg12[%c5_i32_44] : memref<8x!tpu.dma_semaphore, #tpu.memory_space<semaphore_mem>> -> memref<1x!tpu.dma_semaphore, #tpu.memory_space<semaphore_mem>>
    %63 = tpu.memref_squeeze %62 : memref<1x!tpu.dma_semaphore, #tpu.memory_space<semaphore_mem>> -> memref<!tpu.dma_semaphore, #tpu.memory_space<semaphore_mem>>
    tpu.wait_dma2 semaphore(%63 : memref<!tpu.dma_semaphore, #tpu.memory_space<semaphore_mem>>) src(%60 : memref<1x32xf32, #tpu.memory_space<any>>) dst(%61 : memref<1x32xf32, #tpu.memory_space<vmem>>)
    %c6_i32_48 = arith.constant 6 : i32
    %c0_i32_49 = arith.constant 0 : i32
    %64 = tpu.memref_slice %arg2[%30, %c0_i32_49] : memref<512x32xf32, #tpu.memory_space<any>> -> memref<1x32xf32, #tpu.memory_space<any>>
    %c6_i32_50 = arith.constant 6 : i32
    %c0_i32_51 = arith.constant 0 : i32
    %65 = tpu.memref_slice %arg11[%c6_i32_50, %c0_i32_51] : memref<8x32xf32, #tpu.memory_space<vmem>> -> memref<1x32xf32, #tpu.memory_space<vmem>>
    %66 = tpu.memref_slice %arg12[%c6_i32_48] : memref<8x!tpu.dma_semaphore, #tpu.memory_space<semaphore_mem>> -> memref<1x!tpu.dma_semaphore, #tpu.memory_space<semaphore_mem>>
    %67 = tpu.memref_squeeze %66 : memref<1x!tpu.dma_semaphore, #tpu.memory_space<semaphore_mem>> -> memref<!tpu.dma_semaphore, #tpu.memory_space<semaphore_mem>>
    tpu.wait_dma2 semaphore(%67 : memref<!tpu.dma_semaphore, #tpu.memory_space<semaphore_mem>>) src(%64 : memref<1x32xf32, #tpu.memory_space<any>>) dst(%65 : memref<1x32xf32, #tpu.memory_space<vmem>>)
    %c7_i32_52 = arith.constant 7 : i32
    %c0_i32_53 = arith.constant 0 : i32
    %68 = tpu.memref_slice %arg2[%35, %c0_i32_53] : memref<512x32xf32, #tpu.memory_space<any>> -> memref<1x32xf32, #tpu.memory_space<any>>
    %c7_i32_54 = arith.constant 7 : i32
    %c0_i32_55 = arith.constant 0 : i32
    %69 = tpu.memref_slice %arg11[%c7_i32_54, %c0_i32_55] : memref<8x32xf32, #tpu.memory_space<vmem>> -> memref<1x32xf32, #tpu.memory_space<vmem>>
    %70 = tpu.memref_slice %arg12[%c7_i32_52] : memref<8x!tpu.dma_semaphore, #tpu.memory_space<semaphore_mem>> -> memref<1x!tpu.dma_semaphore, #tpu.memory_space<semaphore_mem>>
    %71 = tpu.memref_squeeze %70 : memref<1x!tpu.dma_semaphore, #tpu.memory_space<semaphore_mem>> -> memref<!tpu.dma_semaphore, #tpu.memory_space<semaphore_mem>>
    tpu.wait_dma2 semaphore(%71 : memref<!tpu.dma_semaphore, #tpu.memory_space<semaphore_mem>>) src(%68 : memref<1x32xf32, #tpu.memory_space<any>>) dst(%69 : memref<1x32xf32, #tpu.memory_space<vmem>>)
    %c0_56 = arith.constant 0 : index
    %c0_57 = arith.constant 0 : index
    %72 = vector.load %arg11[%c0_56, %c0_57] : memref<8x32xf32, #tpu.memory_space<vmem>>, vector<8x32xf32>
    %73 = arith.truncf %72 : vector<8x32xf32> to vector<8x32xbf16>
    %c0_58 = arith.constant 0 : index
    %c0_59 = arith.constant 0 : index
    %74 = vector.load %arg3[%c0_58, %c0_59] : memref<8x128xf32, #tpu.memory_space<vmem>>, vector<8x128xf32>
    %c0_60 = arith.constant 0 : index
    %c0_61 = arith.constant 0 : index
    %75 = vector.load %arg4[%c0_60, %c0_61] : memref<8x128xf32, #tpu.memory_space<vmem>>, vector<8x128xf32>
    %c0_62 = arith.constant 0 : index
    %c0_63 = arith.constant 0 : index
    %76 = vector.load %arg5[%c0_62, %c0_63] : memref<32x512xbf16, #tpu.memory_space<vmem>>, vector<32x512xbf16>
    %cst = arith.constant dense<0.000000e+00> : vector<8x512xf32>
    %77 = tpu.matmul %73, %76, %cst {dimension_numbers = #tpu.dot_dimension_numbers<[1], [0], [0], [1], [0, 0, 1, 1], [], []>} : vector<8x32xbf16>, vector<32x512xbf16>, vector<8x512xf32> -> vector<8x512xf32>
    %78 = arith.truncf %74 : vector<8x128xf32> to vector<8x128xbf16>
    %c0_64 = arith.constant 0 : index
    %c0_65 = arith.constant 0 : index
    %79 = vector.load %arg6[%c0_64, %c0_65] : memref<128x512xbf16, #tpu.memory_space<vmem>>, vector<128x512xbf16>
    %cst_66 = arith.constant dense<0.000000e+00> : vector<8x512xf32>
    %80 = tpu.matmul %78, %79, %cst_66 {dimension_numbers = #tpu.dot_dimension_numbers<[1], [0], [0], [1], [0, 0, 1, 1], [], []>} : vector<8x128xbf16>, vector<128x512xbf16>, vector<8x512xf32> -> vector<8x512xf32>
    %81 = arith.addf %77, %80 : vector<8x512xf32>
    %c0_67 = arith.constant 0 : index
    %c0_68 = arith.constant 0 : index
    %82 = vector.load %arg7[%c0_67, %c0_68] : memref<1x512xf32, #tpu.memory_space<vmem>>, vector<1x512xf32>
    %83 = vector.broadcast %82 : vector<1x512xf32> to vector<8x512xf32>
    %84 = arith.addf %81, %83 : vector<8x512xf32>
    %85 = vector.extract_strided_slice %84 {offsets = [0, 0], sizes = [8, 128], strides = [1, 1]} : vector<8x512xf32> to vector<8x128xf32>
    %86 = arith.negf %85 : vector<8x128xf32>
    %87 = math.exp %86 : vector<8x128xf32>
    %cst_69 = arith.constant 1.000000e+00 : f32
    %88 = vector.broadcast %cst_69 : f32 to vector<8x128xf32>
    %89 = arith.addf %88, %87 : vector<8x128xf32>
    %90 = arith.divf %88, %89 : vector<8x128xf32>
    %91 = vector.extract_strided_slice %84 {offsets = [0, 128], sizes = [8, 128], strides = [1, 1]} : vector<8x512xf32> to vector<8x128xf32>
    %92 = arith.negf %91 : vector<8x128xf32>
    %93 = math.exp %92 : vector<8x128xf32>
    %cst_70 = arith.constant 1.000000e+00 : f32
    %94 = vector.broadcast %cst_70 : f32 to vector<8x128xf32>
    %95 = arith.addf %94, %93 : vector<8x128xf32>
    %96 = arith.divf %94, %95 : vector<8x128xf32>
    %97 = vector.extract_strided_slice %84 {offsets = [0, 256], sizes = [8, 128], strides = [1, 1]} : vector<8x512xf32> to vector<8x128xf32>
    %98 = math.tanh %97 : vector<8x128xf32>
    %99 = vector.extract_strided_slice %84 {offsets = [0, 384], sizes = [8, 128], strides = [1, 1]} : vector<8x512xf32> to vector<8x128xf32>
    %100 = arith.negf %99 : vector<8x128xf32>
    %101 = math.exp %100 : vector<8x128xf32>
    %cst_71 = arith.constant 1.000000e+00 : f32
    %102 = vector.broadcast %cst_71 : f32 to vector<8x128xf32>
    %103 = arith.addf %102, %101 : vector<8x128xf32>
    %104 = arith.divf %102, %103 : vector<8x128xf32>
    %105 = arith.mulf %96, %75 : vector<8x128xf32>
    %106 = arith.mulf %90, %98 : vector<8x128xf32>
    %107 = arith.addf %105, %106 : vector<8x128xf32>
    %108 = math.tanh %107 : vector<8x128xf32>
    %109 = arith.mulf %104, %108 : vector<8x128xf32>
    %c0_72 = arith.constant 0 : index
    %c0_73 = arith.constant 0 : index
    %110 = vector.load %arg9[%c0_72, %c0_73] : memref<8x128xf32, #tpu.memory_space<vmem>>, vector<8x128xf32>
    tpu.vector_store %arg9[%c0_72, %c0_73], %109 {strides = array<i32>} : memref<8x128xf32, #tpu.memory_space<vmem>>, vector<8x128xf32>,
    %c0_74 = arith.constant 0 : index
    %c0_75 = arith.constant 0 : index
    %111 = vector.load %arg10[%c0_74, %c0_75] : memref<8x128xf32, #tpu.memory_space<vmem>>, vector<8x128xf32>
    tpu.vector_store %arg10[%c0_74, %c0_75], %107 {strides = array<i32>} : memref<8x128xf32, #tpu.memory_space<vmem>>, vector<8x128xf32>,
    %112 = arith.truncf %109 : vector<8x128xf32> to vector<8x128xbf16>
    %c0_76 = arith.constant 0 : index
    %c0_77 = arith.constant 0 : index
    %113 = vector.load %arg8[%c0_76, %c0_77] : memref<8x128xbf16, #tpu.memory_space<vmem>>, vector<8x128xbf16>
    tpu.vector_store %arg8[%c0_76, %c0_77], %112 {strides = array<i32>} : memref<8x128xbf16, #tpu.memory_space<vmem>>, vector<8x128xbf16>,
    return
  }
  func.func @transform_1(%arg0: i32, %arg1: memref<8xi32, #tpu.memory_space<smem>>) -> (i32, i32) {
    %c0_i32 = arith.constant 0 : i32
    %c0_i32_0 = arith.constant 0 : i32
    %c0_i32_1 = arith.constant 0 : i32
    return %c0_i32, %c0_i32_0 : i32, i32
  }
  func.func @transform_2(%arg0: i32, %arg1: memref<8xi32, #tpu.memory_space<smem>>) -> (i32, i32) {
    %c0_i32 = arith.constant 0 : i32
    %c0_i32_0 = arith.constant 0 : i32
    %c0_i32_1 = arith.constant 0 : i32
    return %c0_i32, %c0_i32_0 : i32, i32
  }
  func.func @transform_3(%arg0: i32, %arg1: memref<8xi32, #tpu.memory_space<smem>>) -> (i32, i32) {
    %c0_i32 = arith.constant 0 : i32
    %c0_i32_0 = arith.constant 0 : i32
    %c0_i32_1 = arith.constant 0 : i32
    return %c0_i32, %c0_i32_0 : i32, i32
  }
  func.func @transform_4(%arg0: i32, %arg1: memref<8xi32, #tpu.memory_space<smem>>) -> (i32, i32) {
    %c0_i32 = arith.constant 0 : i32
    %c0_i32_0 = arith.constant 0 : i32
    %c0_i32_1 = arith.constant 0 : i32
    return %c0_i32, %c0_i32_0 : i32, i32
  }
  func.func @transform_5(%arg0: i32, %arg1: memref<8xi32, #tpu.memory_space<smem>>) -> (i32, i32) {
    %c0_i32 = arith.constant 0 : i32
    %c0_i32_0 = arith.constant 0 : i32
    %c0_i32_1 = arith.constant 0 : i32
    return %c0_i32, %c0_i32_0 : i32, i32
  }
  func.func @transform_6(%arg0: i32, %arg1: memref<8xi32, #tpu.memory_space<smem>>) -> (i32, i32) {
    %c0_i32 = arith.constant 0 : i32
    %c0_i32_0 = arith.constant 0 : i32
    %c0_i32_1 = arith.constant 0 : i32
    return %c0_i32, %c0_i32_0 : i32, i32
  }
  func.func @transform_7(%arg0: i32, %arg1: memref<8xi32, #tpu.memory_space<smem>>) -> (i32, i32) {
    %c0_i32 = arith.constant 0 : i32
    %c0_i32_0 = arith.constant 0 : i32
    %c0_i32_1 = arith.constant 0 : i32
    return %c0_i32, %c0_i32_0 : i32, i32
  }
  func.func @transform_8(%arg0: i32, %arg1: memref<8xi32, #tpu.memory_space<smem>>) -> (i32, i32) {
    %c0_i32 = arith.constant 0 : i32
    %c0_i32_0 = arith.constant 0 : i32
    %c0_i32_1 = arith.constant 0 : i32
    return %c0_i32, %c0_i32_0 : i32, i32
  }
}

</mosaic_0001>

<llo_original>
// kernel: tpu_custom_call.1
$region0: #{tpu_custom_call.1}
  #allocation0 [shape = 'u32[]', space=smem, size = 0x4, offset = 0x4, fixed_abs, tag = 'smem constant byte address 0x4 - core index']
  #allocation1 [shape = 'u32[144,128]{1,0:T(1,128)}', space=vmem, size = 0x12000, scoped, tag = 'internal scratch']
  #allocation2 [shape = 'f32[8,32]{1,0:T(8,128)}', space=vmem, size = 0x1000, scoped, tag = 'scratch operand']
  #allocation3 [shape = 's32[8]{0}', space=sflag, size = 0x20, scoped, tag = 'scratch operand']
  #allocation4 [shape = 's32[1]{0}', space=sflag, size = 0x4, scoped, tag = 'scoped memory for tpu_custom_call.1']
  #allocation5 [shape = 'u8[512]{0}', space=smem, size = 0x200, scoped, tag = 'prefetched SMEM operand 0']
  #allocation11 [shape = 's32[]', space=sflag, size = 0x4, offset = 0, fixed_abs, tag = 'sflag constant byte address 0x0 - dummy sync flag']
  #allocation12 [shape = 's32[]', space=sflag, size = 0x4, offset = 0, fixed_abs, tag = 'sflag constant byte address 0x0 - dummy sync flag']
  #allocation13 [shape = 's32[]', space=sflag, size = 0x4, offset = 0, fixed_abs, tag = 'sflag constant byte address 0x0 - dummy sync flag']
  #allocation14 [shape = 's32[]', space=sflag, size = 0x4, offset = 0, fixed_abs, tag = 'sflag constant byte address 0x0 - dummy sync flag']
  #allocation15 [shape = 's32[]', space=sflag, size = 0x4, offset = 0, fixed_abs, tag = 'sflag constant byte address 0x0 - dummy sync flag']
  #allocation16 [shape = 's32[]', space=sflag, size = 0x4, offset = 0, fixed_abs, tag = 'sflag constant byte address 0x0 - dummy sync flag']
  #allocation17 [shape = 's32[]', space=sflag, size = 0x4, offset = 0, fixed_abs, tag = 'sflag constant byte address 0x0 - dummy sync flag']
  #allocation18 [shape = 's32[]', space=sflag, size = 0x4, offset = 0, fixed_abs, tag = 'sflag constant byte address 0x0 - dummy sync flag']
  %s0 = inlined_call_operand.vmem [shape: s32[8], index: 0, kind: input, shape index: {}]
  %s1 = inlined_call_operand.vmem [shape: f32[512,32], index: 1, kind: input, shape index: {}]
  %s2 = inlined_call_operand.vmem [shape: f32[8,128], index: 2, kind: input, shape index: {}]
  %s3 = inlined_call_operand.vmem [shape: f32[8,128], index: 3, kind: input, shape index: {}]
  %s4 = inlined_call_operand.vmem [shape: bf16[32,512], index: 4, kind: input, shape index: {}]
  %s5 = inlined_call_operand.vmem [shape: bf16[128,512], index: 5, kind: input, shape index: {}]
  %s6 = inlined_call_operand.vmem [shape: f32[1,512], index: 6, kind: input, shape index: {}]
  %s7 = inlined_call_operand.hbm [shape: bf16[8,128], index: 7, kind: output, shape index: {0}]
  %s8 = inlined_call_operand.hbm [shape: f32[8,128], index: 8, kind: output, shape index: {1}]
  %s9 = inlined_call_operand.hbm [shape: f32[8,128], index: 9, kind: output, shape index: {2}]
  %10 = xla_tuple %s7, %s8, %s9
  %s11 = sld [smem:[#allocation0]]
  $region286: #{tpu_custom_call.1} parent=0
    _
  %s13 = ssub.s32 1, %s11
  %s14 = scalar_select 0, %s13, %s11
  %s15 = sshll.u32 %s0, 4
  %s16 = int_to_ptr.vmem [resolvable:$true] %s15
  %18 = dma.vmem_to_smem %s16, 16, [#allocation5], [#allocation4]
  %19 = dma.done [#allocation4], 16
  %20 = sfence
  $region1: #{tpu_custom_call.1} parent=0
    #allocation6 [shape = 'u8[2048]{0}', space=vmem, size = 0x800, scoped, tag = 'output window, operand 0, single buffered']
    #allocation7 [shape = 's32[1]{0}', space=sflag, size = 0x4, scoped, tag = 'scoped memory for tpu_custom_call.1']
    #allocation8 [shape = 'u8[4096]{0}', space=vmem, size = 0x1000, scoped, tag = 'output window, operand 1, single buffered']
    #allocation9 [shape = 's32[1]{0}', space=sflag, size = 0x4, scoped, tag = 'scoped memory for tpu_custom_call.1']
    #allocation10 [shape = 'u8[4096]{0}', space=vmem, size = 0x1000, scoped, tag = 'output window, operand 2, single buffered']
    %21 = vsyncpa [#allocation7], 0
    %22 = vsyncpa [#allocation9], 0
    // Predicated region
    $region2: #{tpu_custom_call.1} parent=1 // pred_check
      _
    $region3: #{tpu_custom_call.1} parent=1 // pred_check_branch
      %24 = sbr.rel (0) target = $region5
    $region4: #{tpu_custom_call.1} parent=1 // pred_region
      _
    $region5: #{tpu_custom_call.1} parent=1 // pred_fallthru
      _
    // Predicated region
    $region6: #{tpu_custom_call.1} parent=1 // pred_check
      _
    $region7: #{tpu_custom_call.1} parent=1 // pred_check_branch
      %26 = sbr.rel (0) target = $region9
    $region8: #{tpu_custom_call.1} parent=1 // pred_region
      _
    $region9: #{tpu_custom_call.1} parent=1 // pred_fallthru
      _
    // Predicated region
    $region10: #{tpu_custom_call.1} parent=1 // pred_check
      _
    $region11: #{tpu_custom_call.1} parent=1 // pred_check_branch
      %28 = sbr.rel (0) target = $region13
    $region12: #{tpu_custom_call.1} parent=1 // pred_region
      _
    $region13: #{tpu_custom_call.1} parent=1 // pred_fallthru
      _
    // Predicated region
    $region14: #{tpu_custom_call.1} parent=1 // pred_check
      _
    $region15: #{tpu_custom_call.1} parent=1 // pred_check_branch
      %30 = sbr.rel (0) target = $region17
    $region16: #{tpu_custom_call.1} parent=1 // pred_region
      _
    $region17: #{tpu_custom_call.1} parent=1 // pred_fallthru
      _
    // Predicated region
    $region18: #{tpu_custom_call.1} parent=1 // pred_check
      _
    $region19: #{tpu_custom_call.1} parent=1 // pred_check_branch
      %32 = sbr.rel (0) target = $region21
    $region20: #{tpu_custom_call.1} parent=1 // pred_region
      _
    $region21: #{tpu_custom_call.1} parent=1 // pred_fallthru
      _
    %s34 = sld [smem:[#allocation5]]
    %s35 = scalar_lea.vmem %s1, %s34
    %p37 = scmp.lt.u32.totalorder 1, 8
    %p38 = pneg %p37
    // Predicated region
    $region22: #{tpu_custom_call.1} parent=1 // pred_check
      _
    $region23: #{tpu_custom_call.1} parent=1 // pred_check_branch
      %40 = sbr.rel (%p37) target = $region25
    $region24: #{tpu_custom_call.1} parent=1 // pred_region
      %s55 = sand.u32 1, 7
      %p56 = scmp.eq.s32.totalorder %s55, 0
      %p57 = pneg %p56
      // Predicated region
      $region37: #{tpu_custom_call.1} parent=24 // pred_check
        _
      $region38: #{tpu_custom_call.1} parent=24 // pred_check_branch
        %59 = sbr.rel (%p56) target = $region40
      $region39: #{tpu_custom_call.1} parent=24 // pred_region
        %s60 = sand.u32 1, 7
        %s61 = ssub.s32 1, %s60
        %s62 = scalar_lea.vmem %s35, %s61
        %s63 = ssub.s32 1, %s60
        %s64 = scalar_lea.vmem [#allocation2], %s63
        %s65 = sshllo.u32 0, %s60
        loop: start=0, step=1, limit=1
        $region41: #{tpu_custom_call.1} parent=39 // loop_pre_header
          _
        $region42: #{tpu_custom_call.1} parent=39 // loop_header
          %s67 = sphi 0, %s71
          %p68 = scmp.ge.s32.totalorder %s67, 1
          %s72 = sphi %s62, %s62
          %s73 = sphi %s64, %s64
        $region43: #{tpu_custom_call.1} parent=39 // loop_header_branch
          %70 = sbr.rel (%p68) target = $region47
        $region44: #{tpu_custom_call.1} parent=39 // loop_body
          %v74 = vld [vmem:[%s72] sm:%s65]
          %75 = vst [vmem:[%s73] sm:%s65] %v74
        $region45: #{tpu_custom_call.1} parent=39 // loop_footer
          %s71 = sadd.s32 1, %s67
        $region46: #{tpu_custom_call.1} parent=39 // loop_footer_branch
          %66 = sbr.rel target = $region42
        $region47: #{tpu_custom_call.1} parent=39 // loop_exit
          _
      $region40: #{tpu_custom_call.1} parent=24 // pred_fallthru
        _
    $region25: #{tpu_custom_call.1} parent=1 // pred_fallthru
      _
    // Predicated region
    $region26: #{tpu_custom_call.1} parent=1 // pred_check
      %p41 = pneg %p37
    $region27: #{tpu_custom_call.1} parent=1 // pred_check_branch
      %43 = sbr.rel (%p41) target = $region29
    $region28: #{tpu_custom_call.1} parent=1 // pred_region
      %s44 = sshllo.u32 0, 1
      loop: start=0, step=1, limit=1
      $region30: #{tpu_custom_call.1} parent=28 // loop_pre_header
        _
      $region31: #{tpu_custom_call.1} parent=28 // loop_header
        %s46 = sphi 0, %s50
        %p47 = scmp.ge.s32.totalorder %s46, 1
        %s51 = sphi %s35, %s35
        %s52 = sphi [#allocation2], [#allocation2]
      $region32: #{tpu_custom_call.1} parent=28 // loop_header_branch
        %49 = sbr.rel (%p47) target = $region36
      $region33: #{tpu_custom_call.1} parent=28 // loop_body
        %v53 = vld [vmem:[%s51] sm:%s44]
        %54 = vst [vmem:[%s52] sm:%s44] %v53
      $region34: #{tpu_custom_call.1} parent=28 // loop_footer
        %s50 = sadd.s32 1, %s46
      $region35: #{tpu_custom_call.1} parent=28 // loop_footer_branch
        %45 = sbr.rel target = $region31
      $region36: #{tpu_custom_call.1} parent=28 // loop_exit
        _
    $region29: #{tpu_custom_call.1} parent=1 // pred_fallthru
      _
    // Predicated region
    $region48: #{tpu_custom_call.1} parent=1 // pred_check
      _
    $region49: #{tpu_custom_call.1} parent=1 // pred_check_branch
      %78 = sbr.rel (0) target = $region51
    $region50: #{tpu_custom_call.1} parent=1 // pred_region
      %79 = vsyncadd [#allocation3], 16
    $region51: #{tpu_custom_call.1} parent=1 // pred_fallthru
      _
    %s80 = sld [smem:[#allocation5 + $0x1]]
    %s81 = scalar_lea.vmem %s1, %s80
    %s82 = scalar_lea.vmem [#allocation2], 1
    %s83 = scalar_lea.sflag [#allocation3], 1
    %p85 = scmp.lt.u32.totalorder 1, 8
    %p86 = pneg %p85
    // Predicated region
    $region52: #{tpu_custom_call.1} parent=1 // pred_check
      _
    $region53: #{tpu_custom_call.1} parent=1 // pred_check_branch
      %88 = sbr.rel (%p85) target = $region55
    $region54: #{tpu_custom_call.1} parent=1 // pred_region
      %s103 = sand.u32 1, 7
      %p104 = scmp.eq.s32.totalorder %s103, 0
      %p105 = pneg %p104
      // Predicated region
      $region67: #{tpu_custom_call.1} parent=54 // pred_check
        _
      $region68: #{tpu_custom_call.1} parent=54 // pred_check_branch
        %107 = sbr.rel (%p104) target = $region70
      $region69: #{tpu_custom_call.1} parent=54 // pred_region
        %s108 = sand.u32 1, 7
        %s109 = ssub.s32 1, %s108
        %s110 = scalar_lea.vmem %s81, %s109
        %s111 = ssub.s32 1, %s108
        %s112 = scalar_lea.vmem %s82, %s111 [#allocation2]
        %s113 = sshllo.u32 0, %s108
        loop: start=0, step=1, limit=1
        $region71: #{tpu_custom_call.1} parent=69 // loop_pre_header
          _
        $region72: #{tpu_custom_call.1} parent=69 // loop_header
          %s115 = sphi 0, %s119
          %p116 = scmp.ge.s32.totalorder %s115, 1
          %s120 = sphi %s110, %s110
          %s121 = sphi %s112, %s112
        $region73: #{tpu_custom_call.1} parent=69 // loop_header_branch
          %118 = sbr.rel (%p116) target = $region77
        $region74: #{tpu_custom_call.1} parent=69 // loop_body
          %v122 = vld [vmem:[%s120] sm:%s113]
          %123 = vst [vmem:[%s121] sm:%s113] %v122
        $region75: #{tpu_custom_call.1} parent=69 // loop_footer
          %s119 = sadd.s32 1, %s115
        $region76: #{tpu_custom_call.1} parent=69 // loop_footer_branch
          %114 = sbr.rel target = $region72
        $region77: #{tpu_custom_call.1} parent=69 // loop_exit
          _
      $region70: #{tpu_custom_call.1} parent=54 // pred_fallthru
        _
    $region55: #{tpu_custom_call.1} parent=1 // pred_fallthru
      _
    // Predicated region
    $region56: #{tpu_custom_call.1} parent=1 // pred_check
      %p89 = pneg %p85
    $region57: #{tpu_custom_call.1} parent=1 // pred_check_branch
      %91 = sbr.rel (%p89) target = $region59
    $region58: #{tpu_custom_call.1} parent=1 // pred_region
      %s92 = sshllo.u32 0, 1
      loop: start=0, step=1, limit=1
      $region60: #{tpu_custom_call.1} parent=58 // loop_pre_header
        _
      $region61: #{tpu_custom_call.1} parent=58 // loop_header
        %s94 = sphi 0, %s98
        %p95 = scmp.ge.s32.totalorder %s94, 1
        %s99 = sphi %s81, %s81
        %s100 = sphi %s82, %s82
      $region62: #{tpu_custom_call.1} parent=58 // loop_header_branch
        %97 = sbr.rel (%p95) target = $region66
      $region63: #{tpu_custom_call.1} parent=58 // loop_body
        %v101 = vld [vmem:[%s99] sm:%s92]
        %102 = vst [vmem:[%s100] sm:%s92] %v101
      $region64: #{tpu_custom_call.1} parent=58 // loop_footer
        %s98 = sadd.s32 1, %s94
      $region65: #{tpu_custom_call.1} parent=58 // loop_footer_branch
        %93 = sbr.rel target = $region61
      $region66: #{tpu_custom_call.1} parent=58 // loop_exit
        _
    $region59: #{tpu_custom_call.1} parent=1 // pred_fallthru
      _
    // Predicated region
    $region78: #{tpu_custom_call.1} parent=1 // pred_check
      _
    $region79: #{tpu_custom_call.1} parent=1 // pred_check_branch
      %126 = sbr.rel (0) target = $region81
    $region80: #{tpu_custom_call.1} parent=1 // pred_region
      %127 = vsyncadd %s83, 16
    $region81: #{tpu_custom_call.1} parent=1 // pred_fallthru
      _
    %s128 = sld [smem:[#allocation5 + $0x2]]
    %s129 = scalar_lea.vmem %s1, %s128
    %s130 = scalar_lea.vmem [#allocation2], 2
    %s131 = scalar_lea.sflag [#allocation3], 2
    %p133 = scmp.lt.u32.totalorder 1, 8
    %p134 = pneg %p133
    // Predicated region
    $region82: #{tpu_custom_call.1} parent=1 // pred_check
      _
    $region83: #{tpu_custom_call.1} parent=1 // pred_check_branch
      %136 = sbr.rel (%p133) target = $region85
    $region84: #{tpu_custom_call.1} parent=1 // pred_region
      %s151 = sand.u32 1, 7
      %p152 = scmp.eq.s32.totalorder %s151, 0
      %p153 = pneg %p152
      // Predicated region
      $region97: #{tpu_custom_call.1} parent=84 // pred_check
        _
      $region98: #{tpu_custom_call.1} parent=84 // pred_check_branch
        %155 = sbr.rel (%p152) target = $region100
      $region99: #{tpu_custom_call.1} parent=84 // pred_region
        %s156 = sand.u32 1, 7
        %s157 = ssub.s32 1, %s156
        %s158 = scalar_lea.vmem %s129, %s157
        %s159 = ssub.s32 1, %s156
        %s160 = scalar_lea.vmem %s130, %s159 [#allocation2]
        %s161 = sshllo.u32 0, %s156
        loop: start=0, step=1, limit=1
        $region101: #{tpu_custom_call.1} parent=99 // loop_pre_header
          _
        $region102: #{tpu_custom_call.1} parent=99 // loop_header
          %s163 = sphi 0, %s167
          %p164 = scmp.ge.s32.totalorder %s163, 1
          %s168 = sphi %s158, %s158
          %s169 = sphi %s160, %s160
        $region103: #{tpu_custom_call.1} parent=99 // loop_header_branch
          %166 = sbr.rel (%p164) target = $region107
        $region104: #{tpu_custom_call.1} parent=99 // loop_body
          %v170 = vld [vmem:[%s168] sm:%s161]
          %171 = vst [vmem:[%s169] sm:%s161] %v170
        $region105: #{tpu_custom_call.1} parent=99 // loop_footer
          %s167 = sadd.s32 1, %s163
        $region106: #{tpu_custom_call.1} parent=99 // loop_footer_branch
          %162 = sbr.rel target = $region102
        $region107: #{tpu_custom_call.1} parent=99 // loop_exit
          _
      $region100: #{tpu_custom_call.1} parent=84 // pred_fallthru
        _
    $region85: #{tpu_custom_call.1} parent=1 // pred_fallthru
      _
    // Predicated region
    $region86: #{tpu_custom_call.1} parent=1 // pred_check
      %p137 = pneg %p133
    $region87: #{tpu_custom_call.1} parent=1 // pred_check_branch
      %139 = sbr.rel (%p137) target = $region89
    $region88: #{tpu_custom_call.1} parent=1 // pred_region
      %s140 = sshllo.u32 0, 1
      loop: start=0, step=1, limit=1
      $region90: #{tpu_custom_call.1} parent=88 // loop_pre_header
        _
      $region91: #{tpu_custom_call.1} parent=88 // loop_header
        %s142 = sphi 0, %s146
        %p143 = scmp.ge.s32.totalorder %s142, 1
        %s147 = sphi %s129, %s129
        %s148 = sphi %s130, %s130
      $region92: #{tpu_custom_call.1} parent=88 // loop_header_branch
        %145 = sbr.rel (%p143) target = $region96
      $region93: #{tpu_custom_call.1} parent=88 // loop_body
        %v149 = vld [vmem:[%s147] sm:%s140]
        %150 = vst [vmem:[%s148] sm:%s140] %v149
      $region94: #{tpu_custom_call.1} parent=88 // loop_footer
        %s146 = sadd.s32 1, %s142
      $region95: #{tpu_custom_call.1} parent=88 // loop_footer_branch
        %141 = sbr.rel target = $region91
      $region96: #{tpu_custom_call.1} parent=88 // loop_exit
        _
    $region89: #{tpu_custom_call.1} parent=1 // pred_fallthru
      _
    // Predicated region
    $region108: #{tpu_custom_call.1} parent=1 // pred_check
      _
    $region109: #{tpu_custom_call.1} parent=1 // pred_check_branch
      %174 = sbr.rel (0) target = $region111
    $region110: #{tpu_custom_call.1} parent=1 // pred_region
      %175 = vsyncadd %s131, 16
    $region111: #{tpu_custom_call.1} parent=1 // pred_fallthru
      _
    %s176 = sld [smem:[#allocation5 + $0x3]]
    %s177 = scalar_lea.vmem %s1, %s176
    %s178 = scalar_lea.vmem [#allocation2], 3
    %s179 = scalar_lea.sflag [#allocation3], 3
    %p181 = scmp.lt.u32.totalorder 1, 8
    %p182 = pneg %p181
    // Predicated region
    $region112: #{tpu_custom_call.1} parent=1 // pred_check
      _
    $region113: #{tpu_custom_call.1} parent=1 // pred_check_branch
      %184 = sbr.rel (%p181) target = $region115
    $region114: #{tpu_custom_call.1} parent=1 // pred_region
      %s199 = sand.u32 1, 7
      %p200 = scmp.eq.s32.totalorder %s199, 0
      %p201 = pneg %p200
      // Predicated region
      $region127: #{tpu_custom_call.1} parent=114 // pred_check
        _
      $region128: #{tpu_custom_call.1} parent=114 // pred_check_branch
        %203 = sbr.rel (%p200) target = $region130
      $region129: #{tpu_custom_call.1} parent=114 // pred_region
        %s204 = sand.u32 1, 7
        %s205 = ssub.s32 1, %s204
        %s206 = scalar_lea.vmem %s177, %s205
        %s207 = ssub.s32 1, %s204
        %s208 = scalar_lea.vmem %s178, %s207 [#allocation2]
        %s209 = sshllo.u32 0, %s204
        loop: start=0, step=1, limit=1
        $region131: #{tpu_custom_call.1} parent=129 // loop_pre_header
          _
        $region132: #{tpu_custom_call.1} parent=129 // loop_header
          %s211 = sphi 0, %s215
          %p212 = scmp.ge.s32.totalorder %s211, 1
          %s216 = sphi %s206, %s206
          %s217 = sphi %s208, %s208
        $region133: #{tpu_custom_call.1} parent=129 // loop_header_branch
          %214 = sbr.rel (%p212) target = $region137
        $region134: #{tpu_custom_call.1} parent=129 // loop_body
          %v218 = vld [vmem:[%s216] sm:%s209]
          %219 = vst [vmem:[%s217] sm:%s209] %v218
        $region135: #{tpu_custom_call.1} parent=129 // loop_footer
          %s215 = sadd.s32 1, %s211
        $region136: #{tpu_custom_call.1} parent=129 // loop_footer_branch
          %210 = sbr.rel target = $region132
        $region137: #{tpu_custom_call.1} parent=129 // loop_exit
          _
      $region130: #{tpu_custom_call.1} parent=114 // pred_fallthru
        _
    $region115: #{tpu_custom_call.1} parent=1 // pred_fallthru
      _
    // Predicated region
    $region116: #{tpu_custom_call.1} parent=1 // pred_check
      %p185 = pneg %p181
    $region117: #{tpu_custom_call.1} parent=1 // pred_check_branch
      %187 = sbr.rel (%p185) target = $region119
    $region118: #{tpu_custom_call.1} parent=1 // pred_region
      %s188 = sshllo.u32 0, 1
      loop: start=0, step=1, limit=1
      $region120: #{tpu_custom_call.1} parent=118 // loop_pre_header
        _
      $region121: #{tpu_custom_call.1} parent=118 // loop_header
        %s190 = sphi 0, %s194
        %p191 = scmp.ge.s32.totalorder %s190, 1
        %s195 = sphi %s177, %s177
        %s196 = sphi %s178, %s178
      $region122: #{tpu_custom_call.1} parent=118 // loop_header_branch
        %193 = sbr.rel (%p191) target = $region126
      $region123: #{tpu_custom_call.1} parent=118 // loop_body
        %v197 = vld [vmem:[%s195] sm:%s188]
        %198 = vst [vmem:[%s196] sm:%s188] %v197
      $region124: #{tpu_custom_call.1} parent=118 // loop_footer
        %s194 = sadd.s32 1, %s190
      $region125: #{tpu_custom_call.1} parent=118 // loop_footer_branch
        %189 = sbr.rel target = $region121
      $region126: #{tpu_custom_call.1} parent=118 // loop_exit
        _
    $region119: #{tpu_custom_call.1} parent=1 // pred_fallthru
      _
    // Predicated region
    $region138: #{tpu_custom_call.1} parent=1 // pred_check
      _
    $region139: #{tpu_custom_call.1} parent=1 // pred_check_branch
      %222 = sbr.rel (0) target = $region141
    $region140: #{tpu_custom_call.1} parent=1 // pred_region
      %223 = vsyncadd %s179, 16
    $region141: #{tpu_custom_call.1} parent=1 // pred_fallthru
      _
    %s224 = sld [smem:[#allocation5 + $0x4]]
    %s225 = scalar_lea.vmem %s1, %s224
    %s226 = scalar_lea.vmem [#allocation2], 4
    %s227 = scalar_lea.sflag [#allocation3], 4
    %p229 = scmp.lt.u32.totalorder 1, 8
    %p230 = pneg %p229
    // Predicated region
    $region142: #{tpu_custom_call.1} parent=1 // pred_check
      _
    $region143: #{tpu_custom_call.1} parent=1 // pred_check_branch
      %232 = sbr.rel (%p229) target = $region145
    $region144: #{tpu_custom_call.1} parent=1 // pred_region
      %s247 = sand.u32 1, 7
      %p248 = scmp.eq.s32.totalorder %s247, 0
      %p249 = pneg %p248
      // Predicated region
      $region157: #{tpu_custom_call.1} parent=144 // pred_check
        _
      $region158: #{tpu_custom_call.1} parent=144 // pred_check_branch
        %251 = sbr.rel (%p248) target = $region160
      $region159: #{tpu_custom_call.1} parent=144 // pred_region
        %s252 = sand.u32 1, 7
        %s253 = ssub.s32 1, %s252
        %s254 = scalar_lea.vmem %s225, %s253
        %s255 = ssub.s32 1, %s252
        %s256 = scalar_lea.vmem %s226, %s255 [#allocation2]
        %s257 = sshllo.u32 0, %s252
        loop: start=0, step=1, limit=1
        $region161: #{tpu_custom_call.1} parent=159 // loop_pre_header
          _
        $region162: #{tpu_custom_call.1} parent=159 // loop_header
          %s259 = sphi 0, %s263
          %p260 = scmp.ge.s32.totalorder %s259, 1
          %s264 = sphi %s254, %s254
          %s265 = sphi %s256, %s256
        $region163: #{tpu_custom_call.1} parent=159 // loop_header_branch
          %262 = sbr.rel (%p260) target = $region167
        $region164: #{tpu_custom_call.1} parent=159 // loop_body
          %v266 = vld [vmem:[%s264] sm:%s257]
          %267 = vst [vmem:[%s265] sm:%s257] %v266
        $region165: #{tpu_custom_call.1} parent=159 // loop_footer
          %s263 = sadd.s32 1, %s259
        $region166: #{tpu_custom_call.1} parent=159 // loop_footer_branch
          %258 = sbr.rel target = $region162
        $region167: #{tpu_custom_call.1} parent=159 // loop_exit
          _
      $region160: #{tpu_custom_call.1} parent=144 // pred_fallthru
        _
    $region145: #{tpu_custom_call.1} parent=1 // pred_fallthru
      _
    // Predicated region
    $region146: #{tpu_custom_call.1} parent=1 // pred_check
      %p233 = pneg %p229
    $region147: #{tpu_custom_call.1} parent=1 // pred_check_branch
      %235 = sbr.rel (%p233) target = $region149
    $region148: #{tpu_custom_call.1} parent=1 // pred_region
      %s236 = sshllo.u32 0, 1
      loop: start=0, step=1, limit=1
      $region150: #{tpu_custom_call.1} parent=148 // loop_pre_header
        _
      $region151: #{tpu_custom_call.1} parent=148 // loop_header
        %s238 = sphi 0, %s242
        %p239 = scmp.ge.s32.totalorder %s238, 1
        %s243 = sphi %s225, %s225
        %s244 = sphi %s226, %s226
      $region152: #{tpu_custom_call.1} parent=148 // loop_header_branch
        %241 = sbr.rel (%p239) target = $region156
      $region153: #{tpu_custom_call.1} parent=148 // loop_body
        %v245 = vld [vmem:[%s243] sm:%s236]
        %246 = vst [vmem:[%s244] sm:%s236] %v245
      $region154: #{tpu_custom_call.1} parent=148 // loop_footer
        %s242 = sadd.s32 1, %s238
      $region155: #{tpu_custom_call.1} parent=148 // loop_footer_branch
        %237 = sbr.rel target = $region151
      $region156: #{tpu_custom_call.1} parent=148 // loop_exit
        _
    $region149: #{tpu_custom_call.1} parent=1 // pred_fallthru
      _
    // Predicated region
    $region168: #{tpu_custom_call.1} parent=1 // pred_check
      _
    $region169: #{tpu_custom_call.1} parent=1 // pred_check_branch
      %270 = sbr.rel (0) target = $region171
    $region170: #{tpu_custom_call.1} parent=1 // pred_region
      %271 = vsyncadd %s227, 16
    $region171: #{tpu_custom_call.1} parent=1 // pred_fallthru
      _
    %s272 = sld [smem:[#allocation5 + $0x5]]
    %s273 = scalar_lea.vmem %s1, %s272
    %s274 = scalar_lea.vmem [#allocation2], 5
    %s275 = scalar_lea.sflag [#allocation3], 5
    %p277 = scmp.lt.u32.totalorder 1, 8
    %p278 = pneg %p277
    // Predicated region
    $region172: #{tpu_custom_call.1} parent=1 // pred_check
      _
    $region173: #{tpu_custom_call.1} parent=1 // pred_check_branch
      %280 = sbr.rel (%p277) target = $region175
    $region174: #{tpu_custom_call.1} parent=1 // pred_region
      %s295 = sand.u32 1, 7
      %p296 = scmp.eq.s32.totalorder %s295, 0
      %p297 = pneg %p296
      // Predicated region
      $region187: #{tpu_custom_call.1} parent=174 // pred_check
        _
      $region188: #{tpu_custom_call.1} parent=174 // pred_check_branch
        %299 = sbr.rel (%p296) target = $region190
      $region189: #{tpu_custom_call.1} parent=174 // pred_region
        %s300 = sand.u32 1, 7
        %s301 = ssub.s32 1, %s300
        %s302 = scalar_lea.vmem %s273, %s301
        %s303 = ssub.s32 1, %s300
        %s304 = scalar_lea.vmem %s274, %s303 [#allocation2]
        %s305 = sshllo.u32 0, %s300
        loop: start=0, step=1, limit=1
        $region191: #{tpu_custom_call.1} parent=189 // loop_pre_header
          _
        $region192: #{tpu_custom_call.1} parent=189 // loop_header
          %s307 = sphi 0, %s311
          %p308 = scmp.ge.s32.totalorder %s307, 1
          %s312 = sphi %s302, %s302
          %s313 = sphi %s304, %s304
        $region193: #{tpu_custom_call.1} parent=189 // loop_header_branch
          %310 = sbr.rel (%p308) target = $region197
        $region194: #{tpu_custom_call.1} parent=189 // loop_body
          %v314 = vld [vmem:[%s312] sm:%s305]
          %315 = vst [vmem:[%s313] sm:%s305] %v314
        $region195: #{tpu_custom_call.1} parent=189 // loop_footer
          %s311 = sadd.s32 1, %s307
        $region196: #{tpu_custom_call.1} parent=189 // loop_footer_branch
          %306 = sbr.rel target = $region192
        $region197: #{tpu_custom_call.1} parent=189 // loop_exit
          _
      $region190: #{tpu_custom_call.1} parent=174 // pred_fallthru
        _
    $region175: #{tpu_custom_call.1} parent=1 // pred_fallthru
      _
    // Predicated region
    $region176: #{tpu_custom_call.1} parent=1 // pred_check
      %p281 = pneg %p277
    $region177: #{tpu_custom_call.1} parent=1 // pred_check_branch
      %283 = sbr.rel (%p281) target = $region179
    $region178: #{tpu_custom_call.1} parent=1 // pred_region
      %s284 = sshllo.u32 0, 1
      loop: start=0, step=1, limit=1
      $region180: #{tpu_custom_call.1} parent=178 // loop_pre_header
        _
      $region181: #{tpu_custom_call.1} parent=178 // loop_header
        %s286 = sphi 0, %s290
        %p287 = scmp.ge.s32.totalorder %s286, 1
        %s291 = sphi %s273, %s273
        %s292 = sphi %s274, %s274
      $region182: #{tpu_custom_call.1} parent=178 // loop_header_branch
        %289 = sbr.rel (%p287) target = $region186
      $region183: #{tpu_custom_call.1} parent=178 // loop_body
        %v293 = vld [vmem:[%s291] sm:%s284]
        %294 = vst [vmem:[%s292] sm:%s284] %v293
      $region184: #{tpu_custom_call.1} parent=178 // loop_footer
        %s290 = sadd.s32 1, %s286
      $region185: #{tpu_custom_call.1} parent=178 // loop_footer_branch
        %285 = sbr.rel target = $region181
      $region186: #{tpu_custom_call.1} parent=178 // loop_exit
        _
    $region179: #{tpu_custom_call.1} parent=1 // pred_fallthru
      _
    // Predicated region
    $region198: #{tpu_custom_call.1} parent=1 // pred_check
      _
    $region199: #{tpu_custom_call.1} parent=1 // pred_check_branch
      %318 = sbr.rel (0) target = $region201
    $region200: #{tpu_custom_call.1} parent=1 // pred_region
      %319 = vsyncadd %s275, 16
    $region201: #{tpu_custom_call.1} parent=1 // pred_fallthru
      _
    %s320 = sld [smem:[#allocation5 + $0x6]]
    %s321 = scalar_lea.vmem %s1, %s320
    %s322 = scalar_lea.vmem [#allocation2], 6
    %s323 = scalar_lea.sflag [#allocation3], 6
    %p325 = scmp.lt.u32.totalorder 1, 8
    %p326 = pneg %p325
    // Predicated region
    $region202: #{tpu_custom_call.1} parent=1 // pred_check
      _
    $region203: #{tpu_custom_call.1} parent=1 // pred_check_branch
      %328 = sbr.rel (%p325) target = $region205
    $region204: #{tpu_custom_call.1} parent=1 // pred_region
      %s343 = sand.u32 1, 7
      %p344 = scmp.eq.s32.totalorder %s343, 0
      %p345 = pneg %p344
      // Predicated region
      $region217: #{tpu_custom_call.1} parent=204 // pred_check
        _
      $region218: #{tpu_custom_call.1} parent=204 // pred_check_branch
        %347 = sbr.rel (%p344) target = $region220
      $region219: #{tpu_custom_call.1} parent=204 // pred_region
        %s348 = sand.u32 1, 7
        %s349 = ssub.s32 1, %s348
        %s350 = scalar_lea.vmem %s321, %s349
        %s351 = ssub.s32 1, %s348
        %s352 = scalar_lea.vmem %s322, %s351 [#allocation2]
        %s353 = sshllo.u32 0, %s348
        loop: start=0, step=1, limit=1
        $region221: #{tpu_custom_call.1} parent=219 // loop_pre_header
          _
        $region222: #{tpu_custom_call.1} parent=219 // loop_header
          %s355 = sphi 0, %s359
          %p356 = scmp.ge.s32.totalorder %s355, 1
          %s360 = sphi %s350, %s350
          %s361 = sphi %s352, %s352
        $region223: #{tpu_custom_call.1} parent=219 // loop_header_branch
          %358 = sbr.rel (%p356) target = $region227
        $region224: #{tpu_custom_call.1} parent=219 // loop_body
          %v362 = vld [vmem:[%s360] sm:%s353]
          %363 = vst [vmem:[%s361] sm:%s353] %v362
        $region225: #{tpu_custom_call.1} parent=219 // loop_footer
          %s359 = sadd.s32 1, %s355
        $region226: #{tpu_custom_call.1} parent=219 // loop_footer_branch
          %354 = sbr.rel target = $region222
        $region227: #{tpu_custom_call.1} parent=219 // loop_exit
          _
      $region220: #{tpu_custom_call.1} parent=204 // pred_fallthru
        _
    $region205: #{tpu_custom_call.1} parent=1 // pred_fallthru
      _
    // Predicated region
    $region206: #{tpu_custom_call.1} parent=1 // pred_check
      %p329 = pneg %p325
    $region207: #{tpu_custom_call.1} parent=1 // pred_check_branch
      %331 = sbr.rel (%p329) target = $region209
    $region208: #{tpu_custom_call.1} parent=1 // pred_region
      %s332 = sshllo.u32 0, 1
      loop: start=0, step=1, limit=1
      $region210: #{tpu_custom_call.1} parent=208 // loop_pre_header
        _
      $region211: #{tpu_custom_call.1} parent=208 // loop_header
        %s334 = sphi 0, %s338
        %p335 = scmp.ge.s32.totalorder %s334, 1
        %s339 = sphi %s321, %s321
        %s340 = sphi %s322, %s322
      $region212: #{tpu_custom_call.1} parent=208 // loop_header_branch
        %337 = sbr.rel (%p335) target = $region216
      $region213: #{tpu_custom_call.1} parent=208 // loop_body
        %v341 = vld [vmem:[%s339] sm:%s332]
        %342 = vst [vmem:[%s340] sm:%s332] %v341
      $region214: #{tpu_custom_call.1} parent=208 // loop_footer
        %s338 = sadd.s32 1, %s334
      $region215: #{tpu_custom_call.1} parent=208 // loop_footer_branch
        %333 = sbr.rel target = $region211
      $region216: #{tpu_custom_call.1} parent=208 // loop_exit
        _
    $region209: #{tpu_custom_call.1} parent=1 // pred_fallthru
      _
    // Predicated region
    $region228: #{tpu_custom_call.1} parent=1 // pred_check
      _
    $region229: #{tpu_custom_call.1} parent=1 // pred_check_branch
      %366 = sbr.rel (0) target = $region231
    $region230: #{tpu_custom_call.1} parent=1 // pred_region
      %367 = vsyncadd %s323, 16
    $region231: #{tpu_custom_call.1} parent=1 // pred_fallthru
      _
    %s368 = sld [smem:[#allocation5 + $0x7]]
    %s369 = scalar_lea.vmem %s1, %s368
    %s370 = scalar_lea.vmem [#allocation2], 7
    %s371 = scalar_lea.sflag [#allocation3], 7
    %p373 = scmp.lt.u32.totalorder 1, 8
    %p374 = pneg %p373
    // Predicated region
    $region232: #{tpu_custom_call.1} parent=1 // pred_check
      _
    $region233: #{tpu_custom_call.1} parent=1 // pred_check_branch
      %376 = sbr.rel (%p373) target = $region235
    $region234: #{tpu_custom_call.1} parent=1 // pred_region
      %s391 = sand.u32 1, 7
      %p392 = scmp.eq.s32.totalorder %s391, 0
      %p393 = pneg %p392
      // Predicated region
      $region247: #{tpu_custom_call.1} parent=234 // pred_check
        _
      $region248: #{tpu_custom_call.1} parent=234 // pred_check_branch
        %395 = sbr.rel (%p392) target = $region250
      $region249: #{tpu_custom_call.1} parent=234 // pred_region
        %s396 = sand.u32 1, 7
        %s397 = ssub.s32 1, %s396
        %s398 = scalar_lea.vmem %s369, %s397
        %s399 = ssub.s32 1, %s396
        %s400 = scalar_lea.vmem %s370, %s399 [#allocation2]
        %s401 = sshllo.u32 0, %s396
        loop: start=0, step=1, limit=1
        $region251: #{tpu_custom_call.1} parent=249 // loop_pre_header
          _
        $region252: #{tpu_custom_call.1} parent=249 // loop_header
          %s403 = sphi 0, %s407
          %p404 = scmp.ge.s32.totalorder %s403, 1
          %s408 = sphi %s398, %s398
          %s409 = sphi %s400, %s400
        $region253: #{tpu_custom_call.1} parent=249 // loop_header_branch
          %406 = sbr.rel (%p404) target = $region257
        $region254: #{tpu_custom_call.1} parent=249 // loop_body
          %v410 = vld [vmem:[%s408] sm:%s401]
          %411 = vst [vmem:[%s409] sm:%s401] %v410
        $region255: #{tpu_custom_call.1} parent=249 // loop_footer
          %s407 = sadd.s32 1, %s403
        $region256: #{tpu_custom_call.1} parent=249 // loop_footer_branch
          %402 = sbr.rel target = $region252
        $region257: #{tpu_custom_call.1} parent=249 // loop_exit
          _
      $region250: #{tpu_custom_call.1} parent=234 // pred_fallthru
        _
    $region235: #{tpu_custom_call.1} parent=1 // pred_fallthru
      _
    // Predicated region
    $region236: #{tpu_custom_call.1} parent=1 // pred_check
      %p377 = pneg %p373
    $region237: #{tpu_custom_call.1} parent=1 // pred_check_branch
      %379 = sbr.rel (%p377) target = $region239
    $region238: #{tpu_custom_call.1} parent=1 // pred_region
      %s380 = sshllo.u32 0, 1
      loop: start=0, step=1, limit=1
      $region240: #{tpu_custom_call.1} parent=238 // loop_pre_header
        _
      $region241: #{tpu_custom_call.1} parent=238 // loop_header
        %s382 = sphi 0, %s386
        %p383 = scmp.ge.s32.totalorder %s382, 1
        %s387 = sphi %s369, %s369
        %s388 = sphi %s370, %s370
      $region242: #{tpu_custom_call.1} parent=238 // loop_header_branch
        %385 = sbr.rel (%p383) target = $region246
      $region243: #{tpu_custom_call.1} parent=238 // loop_body
        %v389 = vld [vmem:[%s387] sm:%s380]
        %390 = vst [vmem:[%s388] sm:%s380] %v389
      $region244: #{tpu_custom_call.1} parent=238 // loop_footer
        %s386 = sadd.s32 1, %s382
      $region245: #{tpu_custom_call.1} parent=238 // loop_footer_branch
        %381 = sbr.rel target = $region241
      $region246: #{tpu_custom_call.1} parent=238 // loop_exit
        _
    $region239: #{tpu_custom_call.1} parent=1 // pred_fallthru
      _
    // Predicated region
    $region258: #{tpu_custom_call.1} parent=1 // pred_check
      _
    $region259: #{tpu_custom_call.1} parent=1 // pred_check_branch
      %414 = sbr.rel (0) target = $region261
    $region260: #{tpu_custom_call.1} parent=1 // pred_region
      %415 = vsyncadd %s371, 16
    $region261: #{tpu_custom_call.1} parent=1 // pred_fallthru
      _
    %s416 = smul.u32 1, 1
    %s417 = sshll.u32 %s416, 4
    %418 = dma.done [#allocation3], %s417
    %s419 = sshll.u32 %s416, 4
    %420 = dma.done %s83, %s419
    %s421 = sshll.u32 %s416, 4
    %422 = dma.done %s131, %s421
    %s423 = sshll.u32 %s416, 4
    %424 = dma.done %s179, %s423
    %s425 = sshll.u32 %s416, 4
    %426 = dma.done %s227, %s425
    %s427 = sshll.u32 %s416, 4
    %428 = dma.done %s275, %s427
    %s429 = sshll.u32 %s416, 4
    %430 = dma.done %s323, %s429
    %s431 = sshll.u32 %s416, 4
    %432 = dma.done %s371, %s431
    %v433 = vld [vmem:[#allocation2] sm:$0xff]
    %v434 = vpack.c.bf16 %v433, %v433
    %v435 = vld [vmem:[%s2] sm:$0xff]
    %v436 = vld [vmem:[%s3] sm:$0xff]
    %v437 = vld [vmem:[%s4] sm:$0xff]
    %v438 = vld [vmem:[%s4 + $0x8] sm:$0xff]
    %v439 = vld [vmem:[%s4 + $0x10] sm:$0xff]
    %v440 = vld [vmem:[%s4 + $0x18] sm:$0xff]
    %v441 = vld [vmem:[%s4 + $0x20] sm:$0xff]
    %v442 = vld [vmem:[%s4 + $0x28] sm:$0xff]
    %v443 = vld [vmem:[%s4 + $0x30] sm:$0xff]
    %v444 = vld [vmem:[%s4 + $0x38] sm:$0xff]
    %v445 = vpack.c.bf16 %v435, %v435
    %v446 = vld [vmem:[%s5] sm:$0xff]
    %v447 = vld [vmem:[%s5 + $0x8] sm:$0xff]
    %v448 = vld [vmem:[%s5 + $0x10] sm:$0xff]
    %v449 = vld [vmem:[%s5 + $0x18] sm:$0xff]
    %v450 = vld [vmem:[%s5 + $0x20] sm:$0xff]
    %v451 = vld [vmem:[%s5 + $0x28] sm:$0xff]
    %v452 = vld [vmem:[%s5 + $0x30] sm:$0xff]
    %v453 = vld [vmem:[%s5 + $0x38] sm:$0xff]
    %v454 = vld [vmem:[%s5 + $0x40] sm:$0xff]
    %v455 = vld [vmem:[%s5 + $0x48] sm:$0xff]
    %v456 = vld [vmem:[%s5 + $0x50] sm:$0xff]
    %v457 = vld [vmem:[%s5 + $0x58] sm:$0xff]
    %v458 = vld [vmem:[%s5 + $0x60] sm:$0xff]
    %v459 = vld [vmem:[%s5 + $0x68] sm:$0xff]
    %v460 = vld [vmem:[%s5 + $0x70] sm:$0xff]
    %v461 = vld [vmem:[%s5 + $0x78] sm:$0xff]
    %v462 = vld [vmem:[%s5 + $0x80] sm:$0xff]
    %v463 = vld [vmem:[%s5 + $0x88] sm:$0xff]
    %v464 = vld [vmem:[%s5 + $0x90] sm:$0xff]
    %v465 = vld [vmem:[%s5 + $0x98] sm:$0xff]
    %v466 = vld [vmem:[%s5 + $0xa0] sm:$0xff]
    %v467 = vld [vmem:[%s5 + $0xa8] sm:$0xff]
    %v468 = vld [vmem:[%s5 + $0xb0] sm:$0xff]
    %v469 = vld [vmem:[%s5 + $0xb8] sm:$0xff]
    %v470 = vld [vmem:[%s5 + $0xc0] sm:$0xff]
    %v471 = vld [vmem:[%s5 + $0xc8] sm:$0xff]
    %v472 = vld [vmem:[%s5 + $0xd0] sm:$0xff]
    %v473 = vld [vmem:[%s5 + $0xd8] sm:$0xff]
    %v474 = vld [vmem:[%s5 + $0xe0] sm:$0xff]
    %v475 = vld [vmem:[%s5 + $0xe8] sm:$0xff]
    %v476 = vld [vmem:[%s5 + $0xf0] sm:$0xff]
    %v477 = vld [vmem:[%s5 + $0xf8] sm:$0xff]
    %v510 = vunpack.c.l.b16 %v446
    %v511 = vunpack.c.h.b16 %v446
    %v512 = vunpack.c.l.b16 %v447
    %v513 = vunpack.c.h.b16 %v447
    %v514 = vunpack.c.l.b16 %v448
    %v515 = vunpack.c.h.b16 %v448
    %v516 = vunpack.c.l.b16 %v449
    %v517 = vunpack.c.h.b16 %v449
    %v518 = vunpack.c.l.b16 %v450
    %v519 = vunpack.c.h.b16 %v450
    %v520 = vunpack.c.l.b16 %v451
    %v521 = vunpack.c.h.b16 %v451
    %v522 = vunpack.c.l.b16 %v452
    %v523 = vunpack.c.h.b16 %v452
    %v524 = vunpack.c.l.b16 %v453
    %v525 = vunpack.c.h.b16 %v453
    %v526 = vunpack.c.l.b16 %v454
    %v527 = vunpack.c.h.b16 %v454
    %v528 = vunpack.c.l.b16 %v455
    %v529 = vunpack.c.h.b16 %v455
    %v530 = vunpack.c.l.b16 %v456
    %v531 = vunpack.c.h.b16 %v456
    %v532 = vunpack.c.l.b16 %v457
    %v533 = vunpack.c.h.b16 %v457
    %v534 = vunpack.c.l.b16 %v458
    %v535 = vunpack.c.h.b16 %v458
    %v536 = vunpack.c.l.b16 %v459
    %v537 = vunpack.c.h.b16 %v459
    %v538 = vunpack.c.l.b16 %v460
    %v539 = vunpack.c.h.b16 %v460
    %v540 = vunpack.c.l.b16 %v461
    %v541 = vunpack.c.h.b16 %v461
    %v542 = vunpack.c.l.b16 %v462
    %v543 = vunpack.c.h.b16 %v462
    %v544 = vunpack.c.l.b16 %v463
    %v545 = vunpack.c.h.b16 %v463
    %v546 = vunpack.c.l.b16 %v464
    %v547 = vunpack.c.h.b16 %v464
    %v548 = vunpack.c.l.b16 %v465
    %v549 = vunpack.c.h.b16 %v465
    %v550 = vunpack.c.l.b16 %v466
    %v551 = vunpack.c.h.b16 %v466
    %v552 = vunpack.c.l.b16 %v467
    %v553 = vunpack.c.h.b16 %v467
    %v554 = vunpack.c.l.b16 %v468
    %v555 = vunpack.c.h.b16 %v468
    %v556 = vunpack.c.l.b16 %v469
    %v557 = vunpack.c.h.b16 %v469
    %v558 = vunpack.c.l.b16 %v470
    %v559 = vunpack.c.h.b16 %v470
    %v560 = vunpack.c.l.b16 %v471
    %v561 = vunpack.c.h.b16 %v471
    %v562 = vunpack.c.l.b16 %v472
    %v563 = vunpack.c.h.b16 %v472
    %v564 = vunpack.c.l.b16 %v473
    %v565 = vunpack.c.h.b16 %v473
    %v566 = vunpack.c.l.b16 %v474
    %v567 = vunpack.c.h.b16 %v474
    %v568 = vunpack.c.l.b16 %v475
    %v569 = vunpack.c.h.b16 %v475
    %v570 = vunpack.c.l.b16 %v476
    %v571 = vunpack.c.h.b16 %v476
    %v572 = vunpack.c.l.b16 %v477
    %v573 = vunpack.c.h.b16 %v477
    %v574 = vpack.c.b16 %v514, %v510
    %v575 = vpack.c.b16 %v515, %v511
    %v576 = vpack.c.b16 %v516, %v512
    %v577 = vpack.c.b16 %v517, %v513
    %v578 = vpack.c.b16 %v522, %v518
    %v579 = vpack.c.b16 %v523, %v519
    %v580 = vpack.c.b16 %v524, %v520
    %v581 = vpack.c.b16 %v525, %v521
    %v582 = vpack.c.b16 %v530, %v526
    %v583 = vpack.c.b16 %v531, %v527
    %v584 = vpack.c.b16 %v532, %v528
    %v585 = vpack.c.b16 %v533, %v529
    %v586 = vpack.c.b16 %v538, %v534
    %v587 = vpack.c.b16 %v539, %v535
    %v588 = vpack.c.b16 %v540, %v536
    %v589 = vpack.c.b16 %v541, %v537
    %v590 = vpack.c.b16 %v546, %v542
    %v591 = vpack.c.b16 %v547, %v543
    %v592 = vpack.c.b16 %v548, %v544
    %v593 = vpack.c.b16 %v549, %v545
    %v594 = vpack.c.b16 %v554, %v550
    %v595 = vpack.c.b16 %v555, %v551
    %v596 = vpack.c.b16 %v556, %v552
    %v597 = vpack.c.b16 %v557, %v553
    %v598 = vpack.c.b16 %v562, %v558
    %v599 = vpack.c.b16 %v563, %v559
    %v600 = vpack.c.b16 %v564, %v560
    %v601 = vpack.c.b16 %v565, %v561
    %v602 = vpack.c.b16 %v570, %v566
    %v603 = vpack.c.b16 %v571, %v567
    %v604 = vpack.c.b16 %v572, %v568
    %v605 = vpack.c.b16 %v573, %v569
    %638 = vmatprep.subr.bf16.mxu0 %v575
    %639 = vmatpush1.bf16.msra.mxu0 %v574
    %640 = vmatprep.subr.bf16.mxu0 %v579
    %641 = vmatpush1.bf16.msra.mxu0 %v578
    %642 = vmatprep.subr.bf16.mxu0 %v583
    %643 = vmatpush1.bf16.msra.mxu0 %v582
    %644 = vmatprep.subr.bf16.mxu0 %v587
    %645 = vmatpush1.bf16.msra.mxu0 %v586
    %646 = vmatprep.subr.bf16.mxu0 %v591
    %647 = vmatpush1.bf16.msra.mxu0 %v590
    %648 = vmatprep.subr.bf16.mxu0 %v595
    %649 = vmatpush1.bf16.msra.mxu0 %v594
    %650 = vmatprep.subr.bf16.mxu0 %v599
    %651 = vmatpush1.bf16.msra.mxu0 %v598
    %652 = vmatprep.subr.bf16.mxu0 %v603
    %653 = vmatpush1.bf16.msra.mxu0 %v602
    %654 = vmatprep.subr.bf16.mxu0 0
    %655 = vmatpush1.bf16.msra.mxu0 0
    %656 = vmatprep.subr.bf16.mxu0 0
    %657 = vmatpush1.bf16.msra.mxu0 0
    %658 = vmatprep.subr.bf16.mxu0 0
    %659 = vmatpush1.bf16.msra.mxu0 0
    %660 = vmatprep.subr.bf16.mxu0 0
    %661 = vmatpush1.bf16.msra.mxu0 0
    %662 = vmatprep.subr.bf16.mxu0 0
    %663 = vmatpush1.bf16.msra.mxu0 0
    %664 = vmatprep.subr.bf16.mxu0 0
    %665 = vmatpush1.bf16.msra.mxu0 0
    %666 = vmatprep.subr.bf16.mxu0 0
    %667 = vmatpush1.bf16.msra.mxu0 0
    %668 = vmatprep.subr.bf16.mxu0 0
    %669 = vmatpush1.bf16.msra.mxu0 0
    %670 = vmatprep.mubr.bf16.mxu0 0
    %671 = vmatmul.mubr.bf16.gmra.mrb[0].mxu0 %v445
    %v672 = vpop.f32.mrb[0].mxu0
    %v673 = vadd.f32 0.0, %v672
    %v674 = vpop.f32.mrb[0].mxu0
    %v675 = vadd.f32 0.0, %v674
    %v676 = vpop.f32.mrb[0].mxu0
    %v677 = vpop.f32.mrb[0].mxu0
    %678 = vdwg.mxu0
    %679 = vmatprep.subr.bf16.mxu0 %v577
    %680 = vmatpush1.bf16.msra.mxu0 %v576
    %681 = vmatprep.subr.bf16.mxu0 %v581
    %682 = vmatpush1.bf16.msra.mxu0 %v580
    %683 = vmatprep.subr.bf16.mxu0 %v585
    %684 = vmatpush1.bf16.msra.mxu0 %v584
    %685 = vmatprep.subr.bf16.mxu0 %v589
    %686 = vmatpush1.bf16.msra.mxu0 %v588
    %687 = vmatprep.subr.bf16.mxu0 %v593
    %688 = vmatpush1.bf16.msra.mxu0 %v592
    %689 = vmatprep.subr.bf16.mxu0 %v597
    %690 = vmatpush1.bf16.msra.mxu0 %v596
    %691 = vmatprep.subr.bf16.mxu0 %v601
    %692 = vmatpush1.bf16.msra.mxu0 %v600
    %693 = vmatprep.subr.bf16.mxu0 %v605
    %694 = vmatpush1.bf16.msra.mxu0 %v604
    %695 = vmatprep.subr.bf16.mxu0 0
    %696 = vmatpush1.bf16.msra.mxu0 0
    %697 = vmatprep.subr.bf16.mxu0 0
    %698 = vmatpush1.bf16.msra.mxu0 0
    %699 = vmatprep.subr.bf16.mxu0 0
    %700 = vmatpush1.bf16.msra.mxu0 0
    %701 = vmatprep.subr.bf16.mxu0 0
    %702 = vmatpush1.bf16.msra.mxu0 0
    %703 = vmatprep.subr.bf16.mxu0 0
    %704 = vmatpush1.bf16.msra.mxu0 0
    %705 = vmatprep.subr.bf16.mxu0 0
    %706 = vmatpush1.bf16.msra.mxu0 0
    %707 = vmatprep.subr.bf16.mxu0 0
    %708 = vmatpush1.bf16.msra.mxu0 0
    %709 = vmatprep.subr.bf16.mxu0 0
    %710 = vmatpush1.bf16.msra.mxu0 0
    %711 = vmatprep.mubr.bf16.mxu0 0
    %712 = vmatmul.mubr.bf16.gmra.mrb[0].mxu0 %v445
    %v713 = vpop.f32.mrb[0].mxu0
    %v714 = vadd.f32 0.0, %v713
    %v715 = vpop.f32.mrb[0].mxu0
    %v716 = vadd.f32 0.0, %v715
    %v717 = vpop.f32.mrb[0].mxu0
    %v718 = vpop.f32.mrb[0].mxu0
    %719 = vdwg.mxu0
    %v728 = vunpack.c.l.b16 %v437
    %v729 = vunpack.c.h.b16 %v437
    %v730 = vunpack.c.l.b16 %v438
    %v731 = vunpack.c.h.b16 %v438
    %v732 = vunpack.c.l.b16 %v439
    %v733 = vunpack.c.h.b16 %v439
    %v734 = vunpack.c.l.b16 %v440
    %v735 = vunpack.c.h.b16 %v440
    %v736 = vunpack.c.l.b16 %v441
    %v737 = vunpack.c.h.b16 %v441
    %v738 = vunpack.c.l.b16 %v442
    %v739 = vunpack.c.h.b16 %v442
    %v740 = vunpack.c.l.b16 %v443
    %v741 = vunpack.c.h.b16 %v443
    %v742 = vunpack.c.l.b16 %v444
    %v743 = vunpack.c.h.b16 %v444
    %v744 = vpack.c.b16 %v732, %v728
    %v745 = vpack.c.b16 %v733, %v729
    %v746 = vpack.c.b16 %v734, %v730
    %v747 = vpack.c.b16 %v735, %v731
    %v748 = vpack.c.b16 %v740, %v736
    %v749 = vpack.c.b16 %v741, %v737
    %v750 = vpack.c.b16 %v742, %v738
    %v751 = vpack.c.b16 %v743, %v739
    %vm760 = vcmask 261120
    %v762 = vsel %vm760, %v434, 0
    %764 = vmatprep.subr.bf16.mxu0 %v745
    %765 = vmatpush1.bf16.msra.mxu0 %v744
    %766 = vmatprep.subr.bf16.mxu0 %v749
    %767 = vmatpush1.bf16.msra.mxu0 %v748
    %768 = vmatprep.subr.bf16.mxu0 0
    %769 = vmatpush1.bf16.msra.mxu0 0
    %770 = vmatprep.subr.bf16.mxu0 0
    %771 = vmatpush1.bf16.msra.mxu0 0
    %772 = vmatprep.subr.bf16.mxu0 0
    %773 = vmatpush1.bf16.msra.mxu0 0
    %774 = vmatprep.subr.bf16.mxu0 0
    %775 = vmatpush1.bf16.msra.mxu0 0
    %776 = vmatprep.subr.bf16.mxu0 0
    %777 = vmatpush1.bf16.msra.mxu0 0
    %778 = vmatprep.subr.bf16.mxu0 0
    %779 = vmatpush1.bf16.msra.mxu0 0
    %780 = vmatprep.subr.bf16.mxu0 0
    %781 = vmatpush1.bf16.msra.mxu0 0
    %782 = vmatprep.subr.bf16.mxu0 0
    %783 = vmatpush1.bf16.msra.mxu0 0
    %784 = vmatprep.subr.bf16.mxu0 0
    %785 = vmatpush1.bf16.msra.mxu0 0
    %786 = vmatprep.subr.bf16.mxu0 0
    %787 = vmatpush1.bf16.msra.mxu0 0
    %788 = vmatprep.subr.bf16.mxu0 0
    %789 = vmatpush1.bf16.msra.mxu0 0
    %790 = vmatprep.subr.bf16.mxu0 0
    %791 = vmatpush1.bf16.msra.mxu0 0
    %792 = vmatprep.subr.bf16.mxu0 0
    %793 = vmatpush1.bf16.msra.mxu0 0
    %794 = vmatprep.subr.bf16.mxu0 0
    %795 = vmatpush1.bf16.msra.mxu0 0
    %796 = vmatprep.mubr.bf16.mxu0 0
    %797 = vmatmul.mubr.bf16.gmra.mrb[0].mxu0 %v762
    %v798 = vpop.f32.mrb[0].mxu0
    %v799 = vadd.f32 %v673, %v798
    %v800 = vpop.f32.mrb[0].mxu0
    %v801 = vadd.f32 %v675, %v800
    %v802 = vpop.f32.mrb[0].mxu0
    %v803 = vpop.f32.mrb[0].mxu0
    %804 = vdwg.mxu0
    %805 = vmatprep.subr.bf16.mxu0 %v747
    %806 = vmatpush1.bf16.msra.mxu0 %v746
    %807 = vmatprep.subr.bf16.mxu0 %v751
    %808 = vmatpush1.bf16.msra.mxu0 %v750
    %809 = vmatprep.subr.bf16.mxu0 0
    %810 = vmatpush1.bf16.msra.mxu0 0
    %811 = vmatprep.subr.bf16.mxu0 0
    %812 = vmatpush1.bf16.msra.mxu0 0
    %813 = vmatprep.subr.bf16.mxu0 0
    %814 = vmatpush1.bf16.msra.mxu0 0
    %815 = vmatprep.subr.bf16.mxu0 0
    %816 = vmatpush1.bf16.msra.mxu0 0
    %817 = vmatprep.subr.bf16.mxu0 0
    %818 = vmatpush1.bf16.msra.mxu0 0
    %819 = vmatprep.subr.bf16.mxu0 0
    %820 = vmatpush1.bf16.msra.mxu0 0
    %821 = vmatprep.subr.bf16.mxu0 0
    %822 = vmatpush1.bf16.msra.mxu0 0
    %823 = vmatprep.subr.bf16.mxu0 0
    %824 = vmatpush1.bf16.msra.mxu0 0
    %825 = vmatprep.subr.bf16.mxu0 0
    %826 = vmatpush1.bf16.msra.mxu0 0
    %827 = vmatprep.subr.bf16.mxu0 0
    %828 = vmatpush1.bf16.msra.mxu0 0
    %829 = vmatprep.subr.bf16.mxu0 0
    %830 = vmatpush1.bf16.msra.mxu0 0
    %831 = vmatprep.subr.bf16.mxu0 0
    %832 = vmatpush1.bf16.msra.mxu0 0
    %833 = vmatprep.subr.bf16.mxu0 0
    %834 = vmatpush1.bf16.msra.mxu0 0
    %835 = vmatprep.subr.bf16.mxu0 0
    %836 = vmatpush1.bf16.msra.mxu0 0
    %837 = vmatprep.mubr.bf16.mxu0 0
    %838 = vmatmul.mubr.bf16.gmra.mrb[0].mxu0 %v762
    %v839 = vpop.f32.mrb[0].mxu0
    %v840 = vadd.f32 %v714, %v839
    %v841 = vpop.f32.mrb[0].mxu0
    %v842 = vadd.f32 %v716, %v841
    %v843 = vpop.f32.mrb[0].mxu0
    %v844 = vpop.f32.mrb[0].mxu0
    %845 = vdwg.mxu0
    %v846 = vld [vmem:[%s6] sm:$0xf]
    %v848 = vlaneseq
    %v849 = vshrl.u32 %v848, 7
    %v850 = vsub.s32 0, %v849
    %v851 = vrot.slane %v846, %v850
    %v852 = vlaneseq
    %v853 = vshrl.u32 %v852, 7
    %v854 = vsub.s32 1, %v853
    %v855 = vrot.slane %v846, %v854
    %v856 = vlaneseq
    %v857 = vshrl.u32 %v856, 7
    %v858 = vsub.s32 2, %v857
    %v859 = vrot.slane %v846, %v858
    %v860 = vlaneseq
    %v861 = vshrl.u32 %v860, 7
    %v862 = vsub.s32 3, %v861
    %v863 = vrot.slane %v846, %v862
    %v868 = vadd.f32 %v799, %v851
    %v869 = vadd.f32 %v801, %v855
    %v870 = vadd.f32 %v840, %v859
    %v871 = vadd.f32 %v842, %v863
    %v872 = vxor.u32 %v868, 2147483648
    %v873 = vmul.f32 %v872, 1.442695
    %v874 = vpow.pop %v873
    %v875 = vadd.f32 %v874, 1.0
    %v876 = vrcp.pop %v875
    %v877 = vmul.f32 1.0, %v876
    %v878 = vxor.u32 %v869, 2147483648
    %v879 = vmul.f32 %v878, 1.442695
    %v880 = vpow.pop %v879
    %v881 = vadd.f32 %v880, 1.0
    %v882 = vrcp.pop %v881
    %v883 = vmul.f32 1.0, %v882
    %v884 = vtanh.pop %v870
    %v885 = vxor.u32 %v871, 2147483648
    %v886 = vmul.f32 %v885, 1.442695
    %v887 = vpow.pop %v886
    %v888 = vadd.f32 %v887, 1.0
    %v889 = vrcp.pop %v888
    %v890 = vmul.f32 1.0, %v889
    %v891 = vmul.f32 %v883, %v436
    %v892 = vmul.f32 %v877, %v884
    %v893 = vadd.f32 %v891, %v892
    %v894 = vtanh.pop %v893
    %v895 = vmul.f32 %v890, %v894
    %896 = vst [vmem:[#allocation8] sm:$0xff] %v895
    %897 = vst [vmem:[#allocation10] sm:$0xff] %v893
    %v898 = vpack.c.bf16 %v895, %v895
    %899 = vst [vmem:[#allocation6] sm:$0xf] %v898
    // Predicated region
    $region262: #{tpu_custom_call.1} parent=1 // pred_check
      _
    $region263: #{tpu_custom_call.1} parent=1 // pred_check_branch
      %901 = sbr.rel (0) target = $region265
    $region264: #{tpu_custom_call.1} parent=1 // pred_region
      %s903 = ssub.s32 64, 64
      %904 = vsyncadd [#allocation7], %s903
      %s906 = sshll.u32 [#allocation6], 4
      %s907 = int_to_ptr.vmem [resolvable:$true] %s906
      %909 = dma.vmem_to_hbm [thread:$0]  %s907, 64, %s7, [#allocation7]
    $region265: #{tpu_custom_call.1} parent=1 // pred_fallthru
      _
    // Predicated region
    $region266: #{tpu_custom_call.1} parent=1 // pred_check
      _
    $region267: #{tpu_custom_call.1} parent=1 // pred_check_branch
      %911 = sbr.rel (0) target = $region269
    $region268: #{tpu_custom_call.1} parent=1 // pred_region
      %s913 = ssub.s32 128, 128
      %914 = vsyncadd [#allocation9], %s913
      %s916 = sshll.u32 [#allocation8], 4
      %s917 = int_to_ptr.vmem [resolvable:$true] %s916
      %919 = dma.vmem_to_hbm [thread:$0]  %s917, 128, %s8, [#allocation9]
    $region269: #{tpu_custom_call.1} parent=1 // pred_fallthru
      _
    // Predicated region
    $region270: #{tpu_custom_call.1} parent=1 // pred_check
      _
    $region271: #{tpu_custom_call.1} parent=1 // pred_check_branch
      %921 = sbr.rel (0) target = $region273
    $region272: #{tpu_custom_call.1} parent=1 // pred_region
      %s923 = ssub.s32 128, 128
      %924 = vsyncadd [#allocation9], %s923
      %s926 = sshll.u32 [#allocation10], 4
      %s927 = int_to_ptr.vmem [resolvable:$true] %s926
      %929 = dma.vmem_to_hbm [thread:$0]  %s927, 128, %s9, [#allocation9]
    $region273: #{tpu_custom_call.1} parent=1 // pred_fallthru
      _
    // Predicated region
    $region274: #{tpu_custom_call.1} parent=1 // pred_check
      _
    $region275: #{tpu_custom_call.1} parent=1 // pred_check_branch
      %931 = sbr.rel (0) target = $region277
    $region276: #{tpu_custom_call.1} parent=1 // pred_region
      %932 = dma.done [#allocation7], 64
    $region277: #{tpu_custom_call.1} parent=1 // pred_fallthru
      _
    // Predicated region
    $region278: #{tpu_custom_call.1} parent=1 // pred_check
      _
    $region279: #{tpu_custom_call.1} parent=1 // pred_check_branch
      %934 = sbr.rel (0) target = $region281
    $region280: #{tpu_custom_call.1} parent=1 // pred_region
      %935 = dma.done [#allocation9], 128
    $region281: #{tpu_custom_call.1} parent=1 // pred_fallthru
      _
    // Predicated region
    $region282: #{tpu_custom_call.1} parent=1 // pred_check
      _
    $region283: #{tpu_custom_call.1} parent=1 // pred_check_branch
      %937 = sbr.rel (0) target = $region285
    $region284: #{tpu_custom_call.1} parent=1 // pred_region
      %938 = dma.done [#allocation9], 128
    $region285: #{tpu_custom_call.1} parent=1 // pred_fallthru
      _
    %939 = vsyncpa [#allocation7], 1
    %940 = vsyncpa [#allocation9], 1
  %941 = vsyncmov [#allocation3]
  %s942 = vpop.sfrf %941
  %p943 = scmp.eq.s32.totalorder %s942, 0
  %p944 = pneg %p943
  %946 = shalt.err (%p944)
  %s947 = scalar_lea.sflag [#allocation3], 1
  %948 = vsyncmov %s947
  %s949 = vpop.sfrf %948
  %p950 = scmp.eq.s32.totalorder %s949, 0
  %p951 = pneg %p950
  %953 = shalt.err (%p951)
  %s954 = scalar_lea.sflag [#allocation3], 2
  %955 = vsyncmov %s954
  %s956 = vpop.sfrf %955
  %p957 = scmp.eq.s32.totalorder %s956, 0
  %p958 = pneg %p957
  %960 = shalt.err (%p958)
  %s961 = scalar_lea.sflag [#allocation3], 3
  %962 = vsyncmov %s961
  %s963 = vpop.sfrf %962
  %p964 = scmp.eq.s32.totalorder %s963, 0
  %p965 = pneg %p964
  %967 = shalt.err (%p965)
  %s968 = scalar_lea.sflag [#allocation3], 4
  %969 = vsyncmov %s968
  %s970 = vpop.sfrf %969
  %p971 = scmp.eq.s32.totalorder %s970, 0
  %p972 = pneg %p971
  %974 = shalt.err (%p972)
  %s975 = scalar_lea.sflag [#allocation3], 5
  %976 = vsyncmov %s975
  %s977 = vpop.sfrf %976
  %p978 = scmp.eq.s32.totalorder %s977, 0
  %p979 = pneg %p978
  %981 = shalt.err (%p979)
  %s982 = scalar_lea.sflag [#allocation3], 6
  %983 = vsyncmov %s982
  %s984 = vpop.sfrf %983
  %p985 = scmp.eq.s32.totalorder %s984, 0
  %p986 = pneg %p985
  %988 = shalt.err (%p986)
  %s989 = scalar_lea.sflag [#allocation3], 7
  %990 = vsyncmov %s989
  %s991 = vpop.sfrf %990
  %p992 = scmp.eq.s32.totalorder %s991, 0
  %p993 = pneg %p992
  %995 = shalt.err (%p993)

</llo_original>
